<compile_context>
chip_gen: v6e
topology: v6e:2x2x1
jax: 0.10.0
libtpu: 0.0.40
codegen_flags: <defaults>
</compile_context>

<pallas_src>
import functools

import jax
import jax.numpy as jnp
from jax.experimental import pallas as pl
from jax.experimental.pallas import tpu as pltpu


LANE = 128  # TPU lane width


def _round_up(x, m):
    return pl.cdiv(x, m) * m


def mlp_kernel(x_ref, w1_ref, b1_ref, w2_ref, b2_ref, w3_ref, b3_ref, o_ref):
    # fc1 + ReLU  (bf16 inputs -> MXU -> f32 accumulate; bias/ReLU in f32)
    x = x_ref[...].astype(w1_ref.dtype)
    h1 = jnp.dot(x, w1_ref[...], preferred_element_type=jnp.float32)
    h1 = jnp.maximum(h1 + b1_ref[...], 0.0)
    # fc2 + ReLU
    h2 = jnp.dot(h1.astype(w2_ref.dtype), w2_ref[...],
                 preferred_element_type=jnp.float32)
    h2 = jnp.maximum(h2 + b2_ref[...], 0.0)
    # fc3 (logits, lane-padded to 128, no activation)
    h3 = jnp.dot(h2.astype(w3_ref.dtype), w3_ref[...],
                 preferred_element_type=jnp.float32)
    o_ref[...] = (h3 + b3_ref[...]).astype(o_ref.dtype)


def mlp_forward(x, params, num_classes, *, tm=128):
    """x: [B, C, H, W] (or any [B, ...]); params from init_params()."""
    B = x.shape[0]
    x2d = x.reshape(B, -1).astype(jnp.float32)  # == x.view(x.size(0), -1)
    in_size = x2d.shape[1]

    w1t, b1 = params["w1t"], params["b1"]
    w2t, b2 = params["w2t"], params["b2"]
    w3t, b3 = params["w3t"], params["b3"]      # already lane-padded to 128
    n_pad = w3t.shape[1]

    # Batch tile: multiple of 8 sublanes, capped at 128 rows / tile.
    TM = min(tm, _round_up(B, 8))
    B_pad = _round_up(B, TM)
    if B_pad != B:
        x2d = jnp.pad(x2d, ((0, B_pad - B), (0, 0)))
    grid = (B_pad // TM,)

    resident = lambda shape: pl.BlockSpec(shape, lambda i: (0, 0))

    weight_bytes = sum(int(w.size * w.dtype.itemsize) for w in (w1t, w2t, w3t))
    cost = pl.CostEstimate(
        flops=2 * B_pad * (in_size * 512 + 512 * 256 + 256 * n_pad),
        transcendentals=0,
        bytes_accessed=weight_bytes + x2d.size * 4 + B_pad * n_pad * 4,
    )

    out = pl.pallas_call(
        mlp_kernel,
        out_shape=jax.ShapeDtypeStruct((B_pad, n_pad), jnp.float32),
        grid_spec=pltpu.PrefetchScalarGridSpec(
            num_scalar_prefetch=0,
            grid=grid,
            in_specs=[
                pl.BlockSpec((TM, in_size), lambda i: (i, 0)),  # x: batch-tiled
                resident(w1t.shape), resident(b1.shape),        # weights/biases:
                resident(w2t.shape), resident(b2.shape),        #  VMEM-resident
                resident(w3t.shape), resident(b3.shape),
            ],
            out_specs=pl.BlockSpec((TM, n_pad), lambda i: (i, 0)),
        ),
        compiler_params=pltpu.CompilerParams(
            dimension_semantics=("parallel",),
            vmem_limit_bytes=32 * 1024 * 1024,
        ),
        cost_estimate=cost,
    )(x2d, w1t, b1, w2t, b2, w3t, b3)

    return out[:B, :num_classes]


def init_params(key, input_size, num_classes, *, weight_dtype=jnp.bfloat16):
    """nn.Linear-style init (U(-1/sqrt(fan_in), +)); stores weights
    pre-transposed [in, out] in bf16, biases f32 [1, out], fc3 lane-padded."""
    ks = jax.random.split(key, 6)

    def linear(kw, kb, fan_in, fan_out):
        bound = 1.0 / float(fan_in) ** 0.5
        w = jax.random.uniform(kw, (fan_out, fan_in), jnp.float32, -bound, bound)
        b = jax.random.uniform(kb, (fan_out,), jnp.float32, -bound, bound)
        return w, b

    w1, b1 = linear(ks[0], ks[1], input_size, 512)
    w2, b2 = linear(ks[2], ks[3], 512, 256)
    w3, b3 = linear(ks[4], ks[5], 256, num_classes)

    n_pad = _round_up(num_classes, LANE)
    w3p = jnp.pad(w3, ((0, n_pad - num_classes), (0, 0)))
    b3p = jnp.pad(b3, (0, n_pad - num_classes))

    return {
        "w1t": jnp.asarray(w1.T, weight_dtype), "b1": b1.reshape(1, -1),
        "w2t": jnp.asarray(w2.T, weight_dtype), "b2": b2.reshape(1, -1),
        "w3t": jnp.asarray(w3p.T, weight_dtype), "b3": b3p.reshape(1, -1),
        # f32 originals kept only for the reference check below.
        "w1_f32": w1, "b1_f32": b1,
        "w2_f32": w2, "b2_f32": b2,
        "w3_f32": w3, "b3_f32": b3,
    }


def _reference_same_precision(x2d, params, num_classes):
    """Pure-JAX reference matching the kernel's bf16-weight / f32-acc math."""
    w1t, b1 = params["w1t"], params["b1"]
    w2t, b2 = params["w2t"], params["b2"]
    w3t, b3 = params["w3t"], params["b3"]
    h = jnp.dot(x2d.astype(w1t.dtype), w1t, preferred_element_type=jnp.float32)
    h = jnp.maximum(h + b1, 0.0)
    h = jnp.dot(h.astype(w2t.dtype), w2t, preferred_element_type=jnp.float32)
    h = jnp.maximum(h + b2, 0.0)
    h = jnp.dot(h.astype(w3t.dtype), w3t, preferred_element_type=jnp.float32)
    return (h + b3)[:, :num_classes]


def _reference_f32(x2d, params):
    """Full-precision reference of the original PyTorch module math."""
    h = jnp.maximum(x2d @ params["w1_f32"].T + params["b1_f32"], 0.0)
    h = jnp.maximum(h @ params["w2_f32"].T + params["b2_f32"], 0.0)
    return h @ params["w3_f32"].T + params["b3_f32"]


if __name__ == "__main__":
    key = jax.random.PRNGKey(0)
    kx, kp = jax.random.split(key)

    # Small example consistent with the forward: x flattens to input_size.
    B, C, H, W = 2, 4, 16, 16
    input_size = C * H * W  # 1024
    num_classes = 10

    x = jax.random.normal(kx, (B, C, H, W), dtype=jnp.float32)
    params = init_params(kp, input_size, num_classes)

    out = mlp_forward(x, params, num_classes)
    jax.block_until_ready(out)
    assert out.shape == (B, num_classes)

    x2d = x.reshape(B, -1)
    # Tight check vs a same-precision (bf16 weights, f32 accumulation) reference.
    ref_bf16 = _reference_same_precision(x2d, params, num_classes)
    assert jnp.allclose(out, ref_bf16, atol=2e-2, rtol=2e-2), (
        jnp.max(jnp.abs(out - ref_bf16)))
    # Loose check vs the full-f32 PyTorch-equivalent math.
    ref_f32 = _reference_f32(x2d, params)
    assert jnp.allclose(out, ref_f32, atol=1e-1, rtol=1e-1), (
        jnp.max(jnp.abs(out - ref_f32)))

    print("KERNEL_OK")
</pallas_src>

<mosaic_0001>
module attributes {stable_mosaic.version = 11 : i64} {
  func.func @mlp_kernel(%arg0: i32, %arg1: memref<8x1024xf32, #tpu.memory_space<vmem>>, %arg2: memref<1024x512xbf16, #tpu.memory_space<vmem>>, %arg3: memref<1x512xf32, #tpu.memory_space<vmem>>, %arg4: memref<512x256xbf16, #tpu.memory_space<vmem>>, %arg5: memref<1x256xf32, #tpu.memory_space<vmem>>, %arg6: memref<256x128xbf16, #tpu.memory_space<vmem>>, %arg7: memref<1x128xf32, #tpu.memory_space<vmem>>, %arg8: memref<8x128xf32, #tpu.memory_space<vmem>>) attributes {dimension_semantics = [#tpu.dimension_semantics<parallel>], iteration_bounds = array<i64: 1>, scalar_prefetch = 0 : i64, scratch_operands = 0 : i64, tpu.core_type = #tpu.core_type<tc>, window_params = [{transform_indices = @transform_0, window_bounds = array<i64: 8, 1024>}, {pipeline_mode = #tpu.pipeline_mode<synchronous>, transform_indices = @transform_1, window_bounds = array<i64: 1024, 512>}, {pipeline_mode = #tpu.pipeline_mode<synchronous>, transform_indices = @transform_2, window_bounds = array<i64: 1, 512>}, {pipeline_mode = #tpu.pipeline_mode<synchronous>, transform_indices = @transform_3, window_bounds = array<i64: 512, 256>}, {pipeline_mode = #tpu.pipeline_mode<synchronous>, transform_indices = @transform_4, window_bounds = array<i64: 1, 256>}, {pipeline_mode = #tpu.pipeline_mode<synchronous>, transform_indices = @transform_5, window_bounds = array<i64: 256, 128>}, {pipeline_mode = #tpu.pipeline_mode<synchronous>, transform_indices = @transform_6, window_bounds = array<i64: 1, 128>}, {transform_indices = @transform_7, window_bounds = array<i64: 8, 128>}]} {
    %c0 = arith.constant 0 : index
    %c0_0 = arith.constant 0 : index
    %0 = vector.load %arg1[%c0, %c0_0] : memref<8x1024xf32, #tpu.memory_space<vmem>>, vector<8x1024xf32>
    %1 = arith.truncf %0 : vector<8x1024xf32> to vector<8x1024xbf16>
    %c0_1 = arith.constant 0 : index
    %c0_2 = arith.constant 0 : index
    %2 = vector.load %arg2[%c0_1, %c0_2] : memref<1024x512xbf16, #tpu.memory_space<vmem>>, vector<1024x512xbf16>
    %cst = arith.constant dense<0.000000e+00> : vector<8x512xf32>
    %3 = tpu.matmul %1, %2, %cst {dimension_numbers = #tpu.dot_dimension_numbers<[1], [0], [0], [1], [0, 0, 1, 1], [], []>} : vector<8x1024xbf16>, vector<1024x512xbf16>, vector<8x512xf32> -> vector<8x512xf32>
    %c0_3 = arith.constant 0 : index
    %c0_4 = arith.constant 0 : index
    %4 = vector.load %arg3[%c0_3, %c0_4] : memref<1x512xf32, #tpu.memory_space<vmem>>, vector<1x512xf32>
    %5 = vector.broadcast %4 : vector<1x512xf32> to vector<8x512xf32>
    %6 = arith.addf %3, %5 : vector<8x512xf32>
    %cst_5 = arith.constant 0.000000e+00 : f32
    %7 = vector.broadcast %cst_5 : f32 to vector<8x512xf32>
    %8 = arith.maximumf %6, %7 : vector<8x512xf32>
    %9 = arith.truncf %8 : vector<8x512xf32> to vector<8x512xbf16>
    %c0_6 = arith.constant 0 : index
    %c0_7 = arith.constant 0 : index
    %10 = vector.load %arg4[%c0_6, %c0_7] : memref<512x256xbf16, #tpu.memory_space<vmem>>, vector<512x256xbf16>
    %cst_8 = arith.constant dense<0.000000e+00> : vector<8x256xf32>
    %11 = tpu.matmul %9, %10, %cst_8 {dimension_numbers = #tpu.dot_dimension_numbers<[1], [0], [0], [1], [0, 0, 1, 1], [], []>} : vector<8x512xbf16>, vector<512x256xbf16>, vector<8x256xf32> -> vector<8x256xf32>
    %c0_9 = arith.constant 0 : index
    %c0_10 = arith.constant 0 : index
    %12 = vector.load %arg5[%c0_9, %c0_10] : memref<1x256xf32, #tpu.memory_space<vmem>>, vector<1x256xf32>
    %13 = vector.broadcast %12 : vector<1x256xf32> to vector<8x256xf32>
    %14 = arith.addf %11, %13 : vector<8x256xf32>
    %cst_11 = arith.constant 0.000000e+00 : f32
    %15 = vector.broadcast %cst_11 : f32 to vector<8x256xf32>
    %16 = arith.maximumf %14, %15 : vector<8x256xf32>
    %17 = arith.truncf %16 : vector<8x256xf32> to vector<8x256xbf16>
    %c0_12 = arith.constant 0 : index
    %c0_13 = arith.constant 0 : index
    %18 = vector.load %arg6[%c0_12, %c0_13] : memref<256x128xbf16, #tpu.memory_space<vmem>>, vector<256x128xbf16>
    %cst_14 = arith.constant dense<0.000000e+00> : vector<8x128xf32>
    %19 = tpu.matmul %17, %18, %cst_14 {dimension_numbers = #tpu.dot_dimension_numbers<[1], [0], [0], [1], [0, 0, 1, 1], [], []>} : vector<8x256xbf16>, vector<256x128xbf16>, vector<8x128xf32> -> vector<8x128xf32>
    %c0_15 = arith.constant 0 : index
    %c0_16 = arith.constant 0 : index
    %20 = vector.load %arg7[%c0_15, %c0_16] : memref<1x128xf32, #tpu.memory_space<vmem>>, vector<1x128xf32>
    %21 = vector.broadcast %20 : vector<1x128xf32> to vector<8x128xf32>
    %22 = arith.addf %19, %21 : vector<8x128xf32>
    %c0_17 = arith.constant 0 : index
    %c0_18 = arith.constant 0 : index
    %23 = vector.load %arg8[%c0_17, %c0_18] : memref<8x128xf32, #tpu.memory_space<vmem>>, vector<8x128xf32>
    tpu.vector_store %arg8[%c0_17, %c0_18], %22 {strides = array<i32>} : memref<8x128xf32, #tpu.memory_space<vmem>>, vector<8x128xf32>,
    return
  }
  func.func @transform_0(%arg0: i32) -> (i32, i32) {
    %c0_i32 = arith.constant 0 : i32
    %c0_i32_0 = arith.constant 0 : i32
    return %arg0, %c0_i32 : i32, i32
  }
  func.func @transform_1(%arg0: i32) -> (i32, i32) {
    %c0_i32 = arith.constant 0 : i32
    %c0_i32_0 = arith.constant 0 : i32
    %c0_i32_1 = arith.constant 0 : i32
    return %c0_i32, %c0_i32_0 : i32, i32
  }
  func.func @transform_2(%arg0: i32) -> (i32, i32) {
    %c0_i32 = arith.constant 0 : i32
    %c0_i32_0 = arith.constant 0 : i32
    %c0_i32_1 = arith.constant 0 : i32
    return %c0_i32, %c0_i32_0 : i32, i32
  }
  func.func @transform_3(%arg0: i32) -> (i32, i32) {
    %c0_i32 = arith.constant 0 : i32
    %c0_i32_0 = arith.constant 0 : i32
    %c0_i32_1 = arith.constant 0 : i32
    return %c0_i32, %c0_i32_0 : i32, i32
  }
  func.func @transform_4(%arg0: i32) -> (i32, i32) {
    %c0_i32 = arith.constant 0 : i32
    %c0_i32_0 = arith.constant 0 : i32
    %c0_i32_1 = arith.constant 0 : i32
    return %c0_i32, %c0_i32_0 : i32, i32
  }
  func.func @transform_5(%arg0: i32) -> (i32, i32) {
    %c0_i32 = arith.constant 0 : i32
    %c0_i32_0 = arith.constant 0 : i32
    %c0_i32_1 = arith.constant 0 : i32
    return %c0_i32, %c0_i32_0 : i32, i32
  }
  func.func @transform_6(%arg0: i32) -> (i32, i32) {
    %c0_i32 = arith.constant 0 : i32
    %c0_i32_0 = arith.constant 0 : i32
    %c0_i32_1 = arith.constant 0 : i32
    return %c0_i32, %c0_i32_0 : i32, i32
  }
  func.func @transform_7(%arg0: i32) -> (i32, i32) {
    %c0_i32 = arith.constant 0 : i32
    %c0_i32_0 = arith.constant 0 : i32
    return %arg0, %c0_i32 : i32, i32
  }
}

</mosaic_0001>

<llo_original>
// kernel: tpu_custom_call.1
$region0: #{tpu_custom_call.1}
  #allocation0 [shape = 'u32[]', space=smem, size = 0x4, offset = 0x4, fixed_abs, tag = 'smem constant byte address 0x4 - core index']
  #allocation1 [shape = 'u32[144,128]{1,0:T(1,128)}', space=vmem, size = 0x12000, scoped, tag = 'internal scratch']
  %s0 = inlined_call_operand.hbm [shape: f32[8,1024], index: 0, kind: input, shape index: {}]
  %s1 = inlined_call_operand.hbm [shape: bf16[1024,512], index: 1, kind: input, shape index: {}]
  %s2 = inlined_call_operand.hbm [shape: f32[1,512], index: 2, kind: input, shape index: {}]
  %s3 = inlined_call_operand.hbm [shape: bf16[512,256], index: 3, kind: input, shape index: {}]
  %s4 = inlined_call_operand.vmem [shape: f32[1,256], index: 4, kind: input, shape index: {}]
  %s5 = inlined_call_operand.hbm [shape: bf16[256,128], index: 5, kind: input, shape index: {}]
  %s6 = inlined_call_operand.vmem [shape: f32[1,128], index: 6, kind: input, shape index: {}]
  %s7 = inlined_call_operand.hbm [shape: f32[8,128], index: 7, kind: output, shape index: {}]
  %s8 = sld [smem:[#allocation0]]
  $region58: #{tpu_custom_call.1} parent=0
    _
  %s10 = ssub.s32 1, %s8
  %s11 = scalar_select 0, %s10, %s8
  $region1: #{tpu_custom_call.1} parent=0
    #allocation2 [shape = 'u8[32768]{0}', space=vmem, size = 0x8000, scoped, tag = 'input window, operand 0, single buffered']
    #allocation3 [shape = 's32[1]{0}', space=sflag, size = 0x4, scoped, tag = 'scoped memory for tpu_custom_call.1']
    #allocation4 [shape = 's32[1]{0}', space=sflag, size = 0x4, scoped, tag = 'scoped memory for tpu_custom_call.1']
    #allocation5 [shape = 'u8[1048576]{0}', space=vmem, size = 0x100000, scoped, tag = 'input window, operand 1, single buffered']
    #allocation6 [shape = 's32[1]{0}', space=sflag, size = 0x4, scoped, tag = 'scoped memory for tpu_custom_call.1']
    #allocation7 [shape = 'u8[2048]{0}', space=vmem, size = 0x800, scoped, tag = 'input window, operand 2, single buffered']
    #allocation8 [shape = 'u8[262144]{0}', space=vmem, size = 0x40000, scoped, tag = 'input window, operand 3, single buffered']
    #allocation9 [shape = 's32[1]{0}', space=sflag, size = 0x4, scoped, tag = 'scoped memory for tpu_custom_call.1']
    #allocation10 [shape = 'u8[65536]{0}', space=vmem, size = 0x10000, scoped, tag = 'input window, operand 5, single buffered']
    #allocation11 [shape = 'u8[4096]{0}', space=vmem, size = 0x1000, scoped, tag = 'output window, operand 0, single buffered']
    %12 = vsyncpa [#allocation3], 0
    %13 = vsyncpa [#allocation6], 0
    %14 = vsyncpa [#allocation9], 0
    %15 = vsyncpa [#allocation4], 0
    // Predicated region
    $region2: #{tpu_custom_call.1} parent=1 // pred_check
      _
    $region3: #{tpu_custom_call.1} parent=1 // pred_check_branch
      %17 = sbr.rel (0) target = $region5
    $region4: #{tpu_custom_call.1} parent=1 // pred_region
      %s19 = ssub.s32 1024, 1024
      %20 = vsyncadd [#allocation3], %s19
      %s22 = sshll.u32 [#allocation2], 4
      %s23 = int_to_ptr.vmem [resolvable:$true] %s22
      %25 = dma.hbm_to_vmem [thread:$0]  %s0, 1024, %s23, [#allocation3]
    $region5: #{tpu_custom_call.1} parent=1 // pred_fallthru
      _
    // Predicated region
    $region6: #{tpu_custom_call.1} parent=1 // pred_check
      _
    $region7: #{tpu_custom_call.1} parent=1 // pred_check_branch
      %27 = sbr.rel (0) target = $region9
    $region8: #{tpu_custom_call.1} parent=1 // pred_region
      %s29 = ssub.s32 32768, 32768
      %30 = vsyncadd [#allocation6], %s29
      %s31 = sshll.u32 [#allocation5], 4
      %s32 = int_to_ptr.vmem [resolvable:$true] %s31
      %37 = dma.hbm_to_vmem [thread:$0]  %s1, 32768, %s32, [#allocation6], 256, 256, 16
    $region9: #{tpu_custom_call.1} parent=1 // pred_fallthru
      _
    // Predicated region
    $region10: #{tpu_custom_call.1} parent=1 // pred_check
      _
    $region11: #{tpu_custom_call.1} parent=1 // pred_check_branch
      %39 = sbr.rel (0) target = $region13
    $region12: #{tpu_custom_call.1} parent=1 // pred_region
      %s41 = ssub.s32 64, 64
      %42 = vsyncadd [#allocation6], %s41
      %s44 = sshll.u32 [#allocation7], 4
      %s45 = int_to_ptr.vmem [resolvable:$true] %s44
      %47 = dma.hbm_to_vmem [thread:$0]  %s2, 64, %s45, [#allocation6]
    $region13: #{tpu_custom_call.1} parent=1 // pred_fallthru
      _
    // Predicated region
    $region14: #{tpu_custom_call.1} parent=1 // pred_check
      _
    $region15: #{tpu_custom_call.1} parent=1 // pred_check_branch
      %49 = sbr.rel (0) target = $region17
    $region16: #{tpu_custom_call.1} parent=1 // pred_region
      %s51 = ssub.s32 8192, 8192
      %52 = vsyncadd [#allocation9], %s51
      %s53 = sshll.u32 [#allocation8], 4
      %s54 = int_to_ptr.vmem [resolvable:$true] %s53
      %59 = dma.hbm_to_vmem [thread:$0]  %s3, 8192, %s54, [#allocation9], 128, 128, 8
    $region17: #{tpu_custom_call.1} parent=1 // pred_fallthru
      _
    // Predicated region
    $region18: #{tpu_custom_call.1} parent=1 // pred_check
      _
    $region19: #{tpu_custom_call.1} parent=1 // pred_check_branch
      %61 = sbr.rel (0) target = $region21
    $region20: #{tpu_custom_call.1} parent=1 // pred_region
      _
    $region21: #{tpu_custom_call.1} parent=1 // pred_fallthru
      _
    // Predicated region
    $region22: #{tpu_custom_call.1} parent=1 // pred_check
      _
    $region23: #{tpu_custom_call.1} parent=1 // pred_check_branch
      %63 = sbr.rel (0) target = $region25
    $region24: #{tpu_custom_call.1} parent=1 // pred_region
      %s65 = ssub.s32 2048, 2048
      %66 = vsyncadd [#allocation9], %s65
      %s67 = sshll.u32 [#allocation10], 4
      %s68 = int_to_ptr.vmem [resolvable:$true] %s67
      %73 = dma.hbm_to_vmem [thread:$0]  %s5, 2048, %s68, [#allocation9], 64, 64, 4
    $region25: #{tpu_custom_call.1} parent=1 // pred_fallthru
      _
    // Predicated region
    $region26: #{tpu_custom_call.1} parent=1 // pred_check
      _
    $region27: #{tpu_custom_call.1} parent=1 // pred_check_branch
      %75 = sbr.rel (0) target = $region29
    $region28: #{tpu_custom_call.1} parent=1 // pred_region
      _
    $region29: #{tpu_custom_call.1} parent=1 // pred_fallthru
      _
    // Predicated region
    $region30: #{tpu_custom_call.1} parent=1 // pred_check
      _
    $region31: #{tpu_custom_call.1} parent=1 // pred_check_branch
      %77 = sbr.rel (0) target = $region33
    $region32: #{tpu_custom_call.1} parent=1 // pred_region
      %78 = dma.done [#allocation3], 1024
    $region33: #{tpu_custom_call.1} parent=1 // pred_fallthru
      _
    // Predicated region
    $region34: #{tpu_custom_call.1} parent=1 // pred_check
      _
    $region35: #{tpu_custom_call.1} parent=1 // pred_check_branch
      %80 = sbr.rel (0) target = $region37
    $region36: #{tpu_custom_call.1} parent=1 // pred_region
      %81 = dma.done [#allocation6], 32768
    $region37: #{tpu_custom_call.1} parent=1 // pred_fallthru
      _
    // Predicated region
    $region38: #{tpu_custom_call.1} parent=1 // pred_check
      _
    $region39: #{tpu_custom_call.1} parent=1 // pred_check_branch
      %83 = sbr.rel (0) target = $region41
    $region40: #{tpu_custom_call.1} parent=1 // pred_region
      %84 = dma.done [#allocation6], 64
    $region41: #{tpu_custom_call.1} parent=1 // pred_fallthru
      _
    // Predicated region
    $region42: #{tpu_custom_call.1} parent=1 // pred_check
      _
    $region43: #{tpu_custom_call.1} parent=1 // pred_check_branch
      %86 = sbr.rel (0) target = $region45
    $region44: #{tpu_custom_call.1} parent=1 // pred_region
      %87 = dma.done [#allocation9], 8192
    $region45: #{tpu_custom_call.1} parent=1 // pred_fallthru
      _
    // Predicated region
    $region46: #{tpu_custom_call.1} parent=1 // pred_check
      _
    $region47: #{tpu_custom_call.1} parent=1 // pred_check_branch
      %89 = sbr.rel (0) target = $region49
    $region48: #{tpu_custom_call.1} parent=1 // pred_region
      %90 = dma.done [#allocation9], 2048
    $region49: #{tpu_custom_call.1} parent=1 // pred_fallthru
      _
    %v92 = vld [vmem:[#allocation2] sm:$0xff]
    %v93 = vld [vmem:[#allocation2 + $0x8] sm:$0xff]
    %v94 = vld [vmem:[#allocation2 + $0x10] sm:$0xff]
    %v95 = vld [vmem:[#allocation2 + $0x18] sm:$0xff]
    %v96 = vld [vmem:[#allocation2 + $0x20] sm:$0xff]
    %v97 = vld [vmem:[#allocation2 + $0x28] sm:$0xff]
    %v98 = vld [vmem:[#allocation2 + $0x30] sm:$0xff]
    %v99 = vld [vmem:[#allocation2 + $0x38] sm:$0xff]
    %v100 = vpack.c.bf16 %v92, %v92
    %v101 = vpack.c.bf16 %v93, %v93
    %v102 = vpack.c.bf16 %v94, %v94
    %v103 = vpack.c.bf16 %v95, %v95
    %v104 = vpack.c.bf16 %v96, %v96
    %v105 = vpack.c.bf16 %v97, %v97
    %v106 = vpack.c.bf16 %v98, %v98
    %v107 = vpack.c.bf16 %v99, %v99
    %v108 = vld [vmem:[#allocation5] sm:$0xff]
    %v109 = vld [vmem:[#allocation5 + $0x8] sm:$0xff]
    %v110 = vld [vmem:[#allocation5 + $0x10] sm:$0xff]
    %v111 = vld [vmem:[#allocation5 + $0x18] sm:$0xff]
    %v112 = vld [vmem:[#allocation5 + $0x20] sm:$0xff]
    %v113 = vld [vmem:[#allocation5 + $0x28] sm:$0xff]
    %v114 = vld [vmem:[#allocation5 + $0x30] sm:$0xff]
    %v115 = vld [vmem:[#allocation5 + $0x38] sm:$0xff]
    %v116 = vld [vmem:[#allocation5 + $0x40] sm:$0xff]
    %v117 = vld [vmem:[#allocation5 + $0x48] sm:$0xff]
    %v118 = vld [vmem:[#allocation5 + $0x50] sm:$0xff]
    %v119 = vld [vmem:[#allocation5 + $0x58] sm:$0xff]
    %v120 = vld [vmem:[#allocation5 + $0x60] sm:$0xff]
    %v121 = vld [vmem:[#allocation5 + $0x68] sm:$0xff]
    %v122 = vld [vmem:[#allocation5 + $0x70] sm:$0xff]
    %v123 = vld [vmem:[#allocation5 + $0x78] sm:$0xff]
    %v124 = vld [vmem:[#allocation5 + $0x80] sm:$0xff]
    %v125 = vld [vmem:[#allocation5 + $0x88] sm:$0xff]
    %v126 = vld [vmem:[#allocation5 + $0x90] sm:$0xff]
    %v127 = vld [vmem:[#allocation5 + $0x98] sm:$0xff]
    %v128 = vld [vmem:[#allocation5 + $0xa0] sm:$0xff]
    %v129 = vld [vmem:[#allocation5 + $0xa8] sm:$0xff]
    %v130 = vld [vmem:[#allocation5 + $0xb0] sm:$0xff]
    %v131 = vld [vmem:[#allocation5 + $0xb8] sm:$0xff]
    %v132 = vld [vmem:[#allocation5 + $0xc0] sm:$0xff]
    %v133 = vld [vmem:[#allocation5 + $0xc8] sm:$0xff]
    %v134 = vld [vmem:[#allocation5 + $0xd0] sm:$0xff]
    %v135 = vld [vmem:[#allocation5 + $0xd8] sm:$0xff]
    %v136 = vld [vmem:[#allocation5 + $0xe0] sm:$0xff]
    %v137 = vld [vmem:[#allocation5 + $0xe8] sm:$0xff]
    %v138 = vld [vmem:[#allocation5 + $0xf0] sm:$0xff]
    %v139 = vld [vmem:[#allocation5 + $0xf8] sm:$0xff]
    %v140 = vld [vmem:[#allocation5 + $0x100] sm:$0xff]
    %v141 = vld [vmem:[#allocation5 + $0x108] sm:$0xff]
    %v142 = vld [vmem:[#allocation5 + $0x110] sm:$0xff]
    %v143 = vld [vmem:[#allocation5 + $0x118] sm:$0xff]
    %v144 = vld [vmem:[#allocation5 + $0x120] sm:$0xff]
    %v145 = vld [vmem:[#allocation5 + $0x128] sm:$0xff]
    %v146 = vld [vmem:[#allocation5 + $0x130] sm:$0xff]
    %v147 = vld [vmem:[#allocation5 + $0x138] sm:$0xff]
    %v148 = vld [vmem:[#allocation5 + $0x140] sm:$0xff]
    %v149 = vld [vmem:[#allocation5 + $0x148] sm:$0xff]
    %v150 = vld [vmem:[#allocation5 + $0x150] sm:$0xff]
    %v151 = vld [vmem:[#allocation5 + $0x158] sm:$0xff]
    %v152 = vld [vmem:[#allocation5 + $0x160] sm:$0xff]
    %v153 = vld [vmem:[#allocation5 + $0x168] sm:$0xff]
    %v154 = vld [vmem:[#allocation5 + $0x170] sm:$0xff]
    %v155 = vld [vmem:[#allocation5 + $0x178] sm:$0xff]
    %v156 = vld [vmem:[#allocation5 + $0x180] sm:$0xff]
    %v157 = vld [vmem:[#allocation5 + $0x188] sm:$0xff]
    %v158 = vld [vmem:[#allocation5 + $0x190] sm:$0xff]
    %v159 = vld [vmem:[#allocation5 + $0x198] sm:$0xff]
    %v160 = vld [vmem:[#allocation5 + $0x1a0] sm:$0xff]
    %v161 = vld [vmem:[#allocation5 + $0x1a8] sm:$0xff]
    %v162 = vld [vmem:[#allocation5 + $0x1b0] sm:$0xff]
    %v163 = vld [vmem:[#allocation5 + $0x1b8] sm:$0xff]
    %v164 = vld [vmem:[#allocation5 + $0x1c0] sm:$0xff]
    %v165 = vld [vmem:[#allocation5 + $0x1c8] sm:$0xff]
    %v166 = vld [vmem:[#allocation5 + $0x1d0] sm:$0xff]
    %v167 = vld [vmem:[#allocation5 + $0x1d8] sm:$0xff]
    %v168 = vld [vmem:[#allocation5 + $0x1e0] sm:$0xff]
    %v169 = vld [vmem:[#allocation5 + $0x1e8] sm:$0xff]
    %v170 = vld [vmem:[#allocation5 + $0x1f0] sm:$0xff]
    %v171 = vld [vmem:[#allocation5 + $0x1f8] sm:$0xff]
    %v172 = vld [vmem:[#allocation5 + $0x200] sm:$0xff]
    %v173 = vld [vmem:[#allocation5 + $0x208] sm:$0xff]
    %v174 = vld [vmem:[#allocation5 + $0x210] sm:$0xff]
    %v175 = vld [vmem:[#allocation5 + $0x218] sm:$0xff]
    %v176 = vld [vmem:[#allocation5 + $0x220] sm:$0xff]
    %v177 = vld [vmem:[#allocation5 + $0x228] sm:$0xff]
    %v178 = vld [vmem:[#allocation5 + $0x230] sm:$0xff]
    %v179 = vld [vmem:[#allocation5 + $0x238] sm:$0xff]
    %v180 = vld [vmem:[#allocation5 + $0x240] sm:$0xff]
    %v181 = vld [vmem:[#allocation5 + $0x248] sm:$0xff]
    %v182 = vld [vmem:[#allocation5 + $0x250] sm:$0xff]
    %v183 = vld [vmem:[#allocation5 + $0x258] sm:$0xff]
    %v184 = vld [vmem:[#allocation5 + $0x260] sm:$0xff]
    %v185 = vld [vmem:[#allocation5 + $0x268] sm:$0xff]
    %v186 = vld [vmem:[#allocation5 + $0x270] sm:$0xff]
    %v187 = vld [vmem:[#allocation5 + $0x278] sm:$0xff]
    %v188 = vld [vmem:[#allocation5 + $0x280] sm:$0xff]
    %v189 = vld [vmem:[#allocation5 + $0x288] sm:$0xff]
    %v190 = vld [vmem:[#allocation5 + $0x290] sm:$0xff]
    %v191 = vld [vmem:[#allocation5 + $0x298] sm:$0xff]
    %v192 = vld [vmem:[#allocation5 + $0x2a0] sm:$0xff]
    %v193 = vld [vmem:[#allocation5 + $0x2a8] sm:$0xff]
    %v194 = vld [vmem:[#allocation5 + $0x2b0] sm:$0xff]
    %v195 = vld [vmem:[#allocation5 + $0x2b8] sm:$0xff]
    %v196 = vld [vmem:[#allocation5 + $0x2c0] sm:$0xff]
    %v197 = vld [vmem:[#allocation5 + $0x2c8] sm:$0xff]
    %v198 = vld [vmem:[#allocation5 + $0x2d0] sm:$0xff]
    %v199 = vld [vmem:[#allocation5 + $0x2d8] sm:$0xff]
    %v200 = vld [vmem:[#allocation5 + $0x2e0] sm:$0xff]
    %v201 = vld [vmem:[#allocation5 + $0x2e8] sm:$0xff]
    %v202 = vld [vmem:[#allocation5 + $0x2f0] sm:$0xff]
    %v203 = vld [vmem:[#allocation5 + $0x2f8] sm:$0xff]
    %v204 = vld [vmem:[#allocation5 + $0x300] sm:$0xff]
    %v205 = vld [vmem:[#allocation5 + $0x308] sm:$0xff]
    %v206 = vld [vmem:[#allocation5 + $0x310] sm:$0xff]
    %v207 = vld [vmem:[#allocation5 + $0x318] sm:$0xff]
    %v208 = vld [vmem:[#allocation5 + $0x320] sm:$0xff]
    %v209 = vld [vmem:[#allocation5 + $0x328] sm:$0xff]
    %v210 = vld [vmem:[#allocation5 + $0x330] sm:$0xff]
    %v211 = vld [vmem:[#allocation5 + $0x338] sm:$0xff]
    %v212 = vld [vmem:[#allocation5 + $0x340] sm:$0xff]
    %v213 = vld [vmem:[#allocation5 + $0x348] sm:$0xff]
    %v214 = vld [vmem:[#allocation5 + $0x350] sm:$0xff]
    %v215 = vld [vmem:[#allocation5 + $0x358] sm:$0xff]
    %v216 = vld [vmem:[#allocation5 + $0x360] sm:$0xff]
    %v217 = vld [vmem:[#allocation5 + $0x368] sm:$0xff]
    %v218 = vld [vmem:[#allocation5 + $0x370] sm:$0xff]
    %v219 = vld [vmem:[#allocation5 + $0x378] sm:$0xff]
    %v220 = vld [vmem:[#allocation5 + $0x380] sm:$0xff]
    %v221 = vld [vmem:[#allocation5 + $0x388] sm:$0xff]
    %v222 = vld [vmem:[#allocation5 + $0x390] sm:$0xff]
    %v223 = vld [vmem:[#allocation5 + $0x398] sm:$0xff]
    %v224 = vld [vmem:[#allocation5 + $0x3a0] sm:$0xff]
    %v225 = vld [vmem:[#allocation5 + $0x3a8] sm:$0xff]
    %v226 = vld [vmem:[#allocation5 + $0x3b0] sm:$0xff]
    %v227 = vld [vmem:[#allocation5 + $0x3b8] sm:$0xff]
    %v228 = vld [vmem:[#allocation5 + $0x3c0] sm:$0xff]
    %v229 = vld [vmem:[#allocation5 + $0x3c8] sm:$0xff]
    %v230 = vld [vmem:[#allocation5 + $0x3d0] sm:$0xff]
    %v231 = vld [vmem:[#allocation5 + $0x3d8] sm:$0xff]
    %v232 = vld [vmem:[#allocation5 + $0x3e0] sm:$0xff]
    %v233 = vld [vmem:[#allocation5 + $0x3e8] sm:$0xff]
    %v234 = vld [vmem:[#allocation5 + $0x3f0] sm:$0xff]
    %v235 = vld [vmem:[#allocation5 + $0x3f8] sm:$0xff]
    %v236 = vld [vmem:[#allocation5 + $0x400] sm:$0xff]
    %v237 = vld [vmem:[#allocation5 + $0x408] sm:$0xff]
    %v238 = vld [vmem:[#allocation5 + $0x410] sm:$0xff]
    %v239 = vld [vmem:[#allocation5 + $0x418] sm:$0xff]
    %v240 = vld [vmem:[#allocation5 + $0x420] sm:$0xff]
    %v241 = vld [vmem:[#allocation5 + $0x428] sm:$0xff]
    %v242 = vld [vmem:[#allocation5 + $0x430] sm:$0xff]
    %v243 = vld [vmem:[#allocation5 + $0x438] sm:$0xff]
    %v244 = vld [vmem:[#allocation5 + $0x440] sm:$0xff]
    %v245 = vld [vmem:[#allocation5 + $0x448] sm:$0xff]
    %v246 = vld [vmem:[#allocation5 + $0x450] sm:$0xff]
    %v247 = vld [vmem:[#allocation5 + $0x458] sm:$0xff]
    %v248 = vld [vmem:[#allocation5 + $0x460] sm:$0xff]
    %v249 = vld [vmem:[#allocation5 + $0x468] sm:$0xff]
    %v250 = vld [vmem:[#allocation5 + $0x470] sm:$0xff]
    %v251 = vld [vmem:[#allocation5 + $0x478] sm:$0xff]
    %v252 = vld [vmem:[#allocation5 + $0x480] sm:$0xff]
    %v253 = vld [vmem:[#allocation5 + $0x488] sm:$0xff]
    %v254 = vld [vmem:[#allocation5 + $0x490] sm:$0xff]
    %v255 = vld [vmem:[#allocation5 + $0x498] sm:$0xff]
    %v256 = vld [vmem:[#allocation5 + $0x4a0] sm:$0xff]
    %v257 = vld [vmem:[#allocation5 + $0x4a8] sm:$0xff]
    %v258 = vld [vmem:[#allocation5 + $0x4b0] sm:$0xff]
    %v259 = vld [vmem:[#allocation5 + $0x4b8] sm:$0xff]
    %v260 = vld [vmem:[#allocation5 + $0x4c0] sm:$0xff]
    %v261 = vld [vmem:[#allocation5 + $0x4c8] sm:$0xff]
    %v262 = vld [vmem:[#allocation5 + $0x4d0] sm:$0xff]
    %v263 = vld [vmem:[#allocation5 + $0x4d8] sm:$0xff]
    %v264 = vld [vmem:[#allocation5 + $0x4e0] sm:$0xff]
    %v265 = vld [vmem:[#allocation5 + $0x4e8] sm:$0xff]
    %v266 = vld [vmem:[#allocation5 + $0x4f0] sm:$0xff]
    %v267 = vld [vmem:[#allocation5 + $0x4f8] sm:$0xff]
    %v268 = vld [vmem:[#allocation5 + $0x500] sm:$0xff]
    %v269 = vld [vmem:[#allocation5 + $0x508] sm:$0xff]
    %v270 = vld [vmem:[#allocation5 + $0x510] sm:$0xff]
    %v271 = vld [vmem:[#allocation5 + $0x518] sm:$0xff]
    %v272 = vld [vmem:[#allocation5 + $0x520] sm:$0xff]
    %v273 = vld [vmem:[#allocation5 + $0x528] sm:$0xff]
    %v274 = vld [vmem:[#allocation5 + $0x530] sm:$0xff]
    %v275 = vld [vmem:[#allocation5 + $0x538] sm:$0xff]
    %v276 = vld [vmem:[#allocation5 + $0x540] sm:$0xff]
    %v277 = vld [vmem:[#allocation5 + $0x548] sm:$0xff]
    %v278 = vld [vmem:[#allocation5 + $0x550] sm:$0xff]
    %v279 = vld [vmem:[#allocation5 + $0x558] sm:$0xff]
    %v280 = vld [vmem:[#allocation5 + $0x560] sm:$0xff]
    %v281 = vld [vmem:[#allocation5 + $0x568] sm:$0xff]
    %v282 = vld [vmem:[#allocation5 + $0x570] sm:$0xff]
    %v283 = vld [vmem:[#allocation5 + $0x578] sm:$0xff]
    %v284 = vld [vmem:[#allocation5 + $0x580] sm:$0xff]
    %v285 = vld [vmem:[#allocation5 + $0x588] sm:$0xff]
    %v286 = vld [vmem:[#allocation5 + $0x590] sm:$0xff]
    %v287 = vld [vmem:[#allocation5 + $0x598] sm:$0xff]
    %v288 = vld [vmem:[#allocation5 + $0x5a0] sm:$0xff]
    %v289 = vld [vmem:[#allocation5 + $0x5a8] sm:$0xff]
    %v290 = vld [vmem:[#allocation5 + $0x5b0] sm:$0xff]
    %v291 = vld [vmem:[#allocation5 + $0x5b8] sm:$0xff]
    %v292 = vld [vmem:[#allocation5 + $0x5c0] sm:$0xff]
    %v293 = vld [vmem:[#allocation5 + $0x5c8] sm:$0xff]
    %v294 = vld [vmem:[#allocation5 + $0x5d0] sm:$0xff]
    %v295 = vld [vmem:[#allocation5 + $0x5d8] sm:$0xff]
    %v296 = vld [vmem:[#allocation5 + $0x5e0] sm:$0xff]
    %v297 = vld [vmem:[#allocation5 + $0x5e8] sm:$0xff]
    %v298 = vld [vmem:[#allocation5 + $0x5f0] sm:$0xff]
    %v299 = vld [vmem:[#allocation5 + $0x5f8] sm:$0xff]
    %v300 = vld [vmem:[#allocation5 + $0x600] sm:$0xff]
    %v301 = vld [vmem:[#allocation5 + $0x608] sm:$0xff]
    %v302 = vld [vmem:[#allocation5 + $0x610] sm:$0xff]
    %v303 = vld [vmem:[#allocation5 + $0x618] sm:$0xff]
    %v304 = vld [vmem:[#allocation5 + $0x620] sm:$0xff]
    %v305 = vld [vmem:[#allocation5 + $0x628] sm:$0xff]
    %v306 = vld [vmem:[#allocation5 + $0x630] sm:$0xff]
    %v307 = vld [vmem:[#allocation5 + $0x638] sm:$0xff]
    %v308 = vld [vmem:[#allocation5 + $0x640] sm:$0xff]
    %v309 = vld [vmem:[#allocation5 + $0x648] sm:$0xff]
    %v310 = vld [vmem:[#allocation5 + $0x650] sm:$0xff]
    %v311 = vld [vmem:[#allocation5 + $0x658] sm:$0xff]
    %v312 = vld [vmem:[#allocation5 + $0x660] sm:$0xff]
    %v313 = vld [vmem:[#allocation5 + $0x668] sm:$0xff]
    %v314 = vld [vmem:[#allocation5 + $0x670] sm:$0xff]
    %v315 = vld [vmem:[#allocation5 + $0x678] sm:$0xff]
    %v316 = vld [vmem:[#allocation5 + $0x680] sm:$0xff]
    %v317 = vld [vmem:[#allocation5 + $0x688] sm:$0xff]
    %v318 = vld [vmem:[#allocation5 + $0x690] sm:$0xff]
    %v319 = vld [vmem:[#allocation5 + $0x698] sm:$0xff]
    %v320 = vld [vmem:[#allocation5 + $0x6a0] sm:$0xff]
    %v321 = vld [vmem:[#allocation5 + $0x6a8] sm:$0xff]
    %v322 = vld [vmem:[#allocation5 + $0x6b0] sm:$0xff]
    %v323 = vld [vmem:[#allocation5 + $0x6b8] sm:$0xff]
    %v324 = vld [vmem:[#allocation5 + $0x6c0] sm:$0xff]
    %v325 = vld [vmem:[#allocation5 + $0x6c8] sm:$0xff]
    %v326 = vld [vmem:[#allocation5 + $0x6d0] sm:$0xff]
    %v327 = vld [vmem:[#allocation5 + $0x6d8] sm:$0xff]
    %v328 = vld [vmem:[#allocation5 + $0x6e0] sm:$0xff]
    %v329 = vld [vmem:[#allocation5 + $0x6e8] sm:$0xff]
    %v330 = vld [vmem:[#allocation5 + $0x6f0] sm:$0xff]
    %v331 = vld [vmem:[#allocation5 + $0x6f8] sm:$0xff]
    %v332 = vld [vmem:[#allocation5 + $0x700] sm:$0xff]
    %v333 = vld [vmem:[#allocation5 + $0x708] sm:$0xff]
    %v334 = vld [vmem:[#allocation5 + $0x710] sm:$0xff]
    %v335 = vld [vmem:[#allocation5 + $0x718] sm:$0xff]
    %v336 = vld [vmem:[#allocation5 + $0x720] sm:$0xff]
    %v337 = vld [vmem:[#allocation5 + $0x728] sm:$0xff]
    %v338 = vld [vmem:[#allocation5 + $0x730] sm:$0xff]
    %v339 = vld [vmem:[#allocation5 + $0x738] sm:$0xff]
    %v340 = vld [vmem:[#allocation5 + $0x740] sm:$0xff]
    %v341 = vld [vmem:[#allocation5 + $0x748] sm:$0xff]
    %v342 = vld [vmem:[#allocation5 + $0x750] sm:$0xff]
    %v343 = vld [vmem:[#allocation5 + $0x758] sm:$0xff]
    %v344 = vld [vmem:[#allocation5 + $0x760] sm:$0xff]
    %v345 = vld [vmem:[#allocation5 + $0x768] sm:$0xff]
    %v346 = vld [vmem:[#allocation5 + $0x770] sm:$0xff]
    %v347 = vld [vmem:[#allocation5 + $0x778] sm:$0xff]
    %v348 = vld [vmem:[#allocation5 + $0x780] sm:$0xff]
    %v349 = vld [vmem:[#allocation5 + $0x788] sm:$0xff]
    %v350 = vld [vmem:[#allocation5 + $0x790] sm:$0xff]
    %v351 = vld [vmem:[#allocation5 + $0x798] sm:$0xff]
    %v352 = vld [vmem:[#allocation5 + $0x7a0] sm:$0xff]
    %v353 = vld [vmem:[#allocation5 + $0x7a8] sm:$0xff]
    %v354 = vld [vmem:[#allocation5 + $0x7b0] sm:$0xff]
    %v355 = vld [vmem:[#allocation5 + $0x7b8] sm:$0xff]
    %v356 = vld [vmem:[#allocation5 + $0x7c0] sm:$0xff]
    %v357 = vld [vmem:[#allocation5 + $0x7c8] sm:$0xff]
    %v358 = vld [vmem:[#allocation5 + $0x7d0] sm:$0xff]
    %v359 = vld [vmem:[#allocation5 + $0x7d8] sm:$0xff]
    %v360 = vld [vmem:[#allocation5 + $0x7e0] sm:$0xff]
    %v361 = vld [vmem:[#allocation5 + $0x7e8] sm:$0xff]
    %v362 = vld [vmem:[#allocation5 + $0x7f0] sm:$0xff]
    %v363 = vld [vmem:[#allocation5 + $0x7f8] sm:$0xff]
    %v364 = vld [vmem:[#allocation7] sm:$0xf]
    %v366 = vlaneseq
    %v367 = vshrl.u32 %v366, 7
    %v368 = vsub.s32 0, %v367
    %v369 = vrot.slane %v364, %v368
    %v370 = vlaneseq
    %v371 = vshrl.u32 %v370, 7
    %v372 = vsub.s32 1, %v371
    %v373 = vrot.slane %v364, %v372
    %v374 = vlaneseq
    %v375 = vshrl.u32 %v374, 7
    %v376 = vsub.s32 2, %v375
    %v377 = vrot.slane %v364, %v376
    %v378 = vlaneseq
    %v379 = vshrl.u32 %v378, 7
    %v380 = vsub.s32 3, %v379
    %v381 = vrot.slane %v364, %v380
    %v642 = vunpack.c.l.b16 %v108
    %v643 = vunpack.c.h.b16 %v108
    %v644 = vunpack.c.l.b16 %v109
    %v645 = vunpack.c.h.b16 %v109
    %v646 = vunpack.c.l.b16 %v110
    %v647 = vunpack.c.h.b16 %v110
    %v648 = vunpack.c.l.b16 %v111
    %v649 = vunpack.c.h.b16 %v111
    %v650 = vunpack.c.l.b16 %v112
    %v651 = vunpack.c.h.b16 %v112
    %v652 = vunpack.c.l.b16 %v113
    %v653 = vunpack.c.h.b16 %v113
    %v654 = vunpack.c.l.b16 %v114
    %v655 = vunpack.c.h.b16 %v114
    %v656 = vunpack.c.l.b16 %v115
    %v657 = vunpack.c.h.b16 %v115
    %v658 = vunpack.c.l.b16 %v116
    %v659 = vunpack.c.h.b16 %v116
    %v660 = vunpack.c.l.b16 %v117
    %v661 = vunpack.c.h.b16 %v117
    %v662 = vunpack.c.l.b16 %v118
    %v663 = vunpack.c.h.b16 %v118
    %v664 = vunpack.c.l.b16 %v119
    %v665 = vunpack.c.h.b16 %v119
    %v666 = vunpack.c.l.b16 %v120
    %v667 = vunpack.c.h.b16 %v120
    %v668 = vunpack.c.l.b16 %v121
    %v669 = vunpack.c.h.b16 %v121
    %v670 = vunpack.c.l.b16 %v122
    %v671 = vunpack.c.h.b16 %v122
    %v672 = vunpack.c.l.b16 %v123
    %v673 = vunpack.c.h.b16 %v123
    %v674 = vunpack.c.l.b16 %v124
    %v675 = vunpack.c.h.b16 %v124
    %v676 = vunpack.c.l.b16 %v125
    %v677 = vunpack.c.h.b16 %v125
    %v678 = vunpack.c.l.b16 %v126
    %v679 = vunpack.c.h.b16 %v126
    %v680 = vunpack.c.l.b16 %v127
    %v681 = vunpack.c.h.b16 %v127
    %v682 = vunpack.c.l.b16 %v128
    %v683 = vunpack.c.h.b16 %v128
    %v684 = vunpack.c.l.b16 %v129
    %v685 = vunpack.c.h.b16 %v129
    %v686 = vunpack.c.l.b16 %v130
    %v687 = vunpack.c.h.b16 %v130
    %v688 = vunpack.c.l.b16 %v131
    %v689 = vunpack.c.h.b16 %v131
    %v690 = vunpack.c.l.b16 %v132
    %v691 = vunpack.c.h.b16 %v132
    %v692 = vunpack.c.l.b16 %v133
    %v693 = vunpack.c.h.b16 %v133
    %v694 = vunpack.c.l.b16 %v134
    %v695 = vunpack.c.h.b16 %v134
    %v696 = vunpack.c.l.b16 %v135
    %v697 = vunpack.c.h.b16 %v135
    %v698 = vunpack.c.l.b16 %v136
    %v699 = vunpack.c.h.b16 %v136
    %v700 = vunpack.c.l.b16 %v137
    %v701 = vunpack.c.h.b16 %v137
    %v702 = vunpack.c.l.b16 %v138
    %v703 = vunpack.c.h.b16 %v138
    %v704 = vunpack.c.l.b16 %v139
    %v705 = vunpack.c.h.b16 %v139
    %v706 = vunpack.c.l.b16 %v140
    %v707 = vunpack.c.h.b16 %v140
    %v708 = vunpack.c.l.b16 %v141
    %v709 = vunpack.c.h.b16 %v141
    %v710 = vunpack.c.l.b16 %v142
    %v711 = vunpack.c.h.b16 %v142
    %v712 = vunpack.c.l.b16 %v143
    %v713 = vunpack.c.h.b16 %v143
    %v714 = vunpack.c.l.b16 %v144
    %v715 = vunpack.c.h.b16 %v144
    %v716 = vunpack.c.l.b16 %v145
    %v717 = vunpack.c.h.b16 %v145
    %v718 = vunpack.c.l.b16 %v146
    %v719 = vunpack.c.h.b16 %v146
    %v720 = vunpack.c.l.b16 %v147
    %v721 = vunpack.c.h.b16 %v147
    %v722 = vunpack.c.l.b16 %v148
    %v723 = vunpack.c.h.b16 %v148
    %v724 = vunpack.c.l.b16 %v149
    %v725 = vunpack.c.h.b16 %v149
    %v726 = vunpack.c.l.b16 %v150
    %v727 = vunpack.c.h.b16 %v150
    %v728 = vunpack.c.l.b16 %v151
    %v729 = vunpack.c.h.b16 %v151
    %v730 = vunpack.c.l.b16 %v152
    %v731 = vunpack.c.h.b16 %v152
    %v732 = vunpack.c.l.b16 %v153
    %v733 = vunpack.c.h.b16 %v153
    %v734 = vunpack.c.l.b16 %v154
    %v735 = vunpack.c.h.b16 %v154
    %v736 = vunpack.c.l.b16 %v155
    %v737 = vunpack.c.h.b16 %v155
    %v738 = vunpack.c.l.b16 %v156
    %v739 = vunpack.c.h.b16 %v156
    %v740 = vunpack.c.l.b16 %v157
    %v741 = vunpack.c.h.b16 %v157
    %v742 = vunpack.c.l.b16 %v158
    %v743 = vunpack.c.h.b16 %v158
    %v744 = vunpack.c.l.b16 %v159
    %v745 = vunpack.c.h.b16 %v159
    %v746 = vunpack.c.l.b16 %v160
    %v747 = vunpack.c.h.b16 %v160
    %v748 = vunpack.c.l.b16 %v161
    %v749 = vunpack.c.h.b16 %v161
    %v750 = vunpack.c.l.b16 %v162
    %v751 = vunpack.c.h.b16 %v162
    %v752 = vunpack.c.l.b16 %v163
    %v753 = vunpack.c.h.b16 %v163
    %v754 = vunpack.c.l.b16 %v164
    %v755 = vunpack.c.h.b16 %v164
    %v756 = vunpack.c.l.b16 %v165
    %v757 = vunpack.c.h.b16 %v165
    %v758 = vunpack.c.l.b16 %v166
    %v759 = vunpack.c.h.b16 %v166
    %v760 = vunpack.c.l.b16 %v167
    %v761 = vunpack.c.h.b16 %v167
    %v762 = vunpack.c.l.b16 %v168
    %v763 = vunpack.c.h.b16 %v168
    %v764 = vunpack.c.l.b16 %v169
    %v765 = vunpack.c.h.b16 %v169
    %v766 = vunpack.c.l.b16 %v170
    %v767 = vunpack.c.h.b16 %v170
    %v768 = vunpack.c.l.b16 %v171
    %v769 = vunpack.c.h.b16 %v171
    %v770 = vunpack.c.l.b16 %v172
    %v771 = vunpack.c.h.b16 %v172
    %v772 = vunpack.c.l.b16 %v173
    %v773 = vunpack.c.h.b16 %v173
    %v774 = vunpack.c.l.b16 %v174
    %v775 = vunpack.c.h.b16 %v174
    %v776 = vunpack.c.l.b16 %v175
    %v777 = vunpack.c.h.b16 %v175
    %v778 = vunpack.c.l.b16 %v176
    %v779 = vunpack.c.h.b16 %v176
    %v780 = vunpack.c.l.b16 %v177
    %v781 = vunpack.c.h.b16 %v177
    %v782 = vunpack.c.l.b16 %v178
    %v783 = vunpack.c.h.b16 %v178
    %v784 = vunpack.c.l.b16 %v179
    %v785 = vunpack.c.h.b16 %v179
    %v786 = vunpack.c.l.b16 %v180
    %v787 = vunpack.c.h.b16 %v180
    %v788 = vunpack.c.l.b16 %v181
    %v789 = vunpack.c.h.b16 %v181
    %v790 = vunpack.c.l.b16 %v182
    %v791 = vunpack.c.h.b16 %v182
    %v792 = vunpack.c.l.b16 %v183
    %v793 = vunpack.c.h.b16 %v183
    %v794 = vunpack.c.l.b16 %v184
    %v795 = vunpack.c.h.b16 %v184
    %v796 = vunpack.c.l.b16 %v185
    %v797 = vunpack.c.h.b16 %v185
    %v798 = vunpack.c.l.b16 %v186
    %v799 = vunpack.c.h.b16 %v186
    %v800 = vunpack.c.l.b16 %v187
    %v801 = vunpack.c.h.b16 %v187
    %v802 = vunpack.c.l.b16 %v188
    %v803 = vunpack.c.h.b16 %v188
    %v804 = vunpack.c.l.b16 %v189
    %v805 = vunpack.c.h.b16 %v189
    %v806 = vunpack.c.l.b16 %v190
    %v807 = vunpack.c.h.b16 %v190
    %v808 = vunpack.c.l.b16 %v191
    %v809 = vunpack.c.h.b16 %v191
    %v810 = vunpack.c.l.b16 %v192
    %v811 = vunpack.c.h.b16 %v192
    %v812 = vunpack.c.l.b16 %v193
    %v813 = vunpack.c.h.b16 %v193
    %v814 = vunpack.c.l.b16 %v194
    %v815 = vunpack.c.h.b16 %v194
    %v816 = vunpack.c.l.b16 %v195
    %v817 = vunpack.c.h.b16 %v195
    %v818 = vunpack.c.l.b16 %v196
    %v819 = vunpack.c.h.b16 %v196
    %v820 = vunpack.c.l.b16 %v197
    %v821 = vunpack.c.h.b16 %v197
    %v822 = vunpack.c.l.b16 %v198
    %v823 = vunpack.c.h.b16 %v198
    %v824 = vunpack.c.l.b16 %v199
    %v825 = vunpack.c.h.b16 %v199
    %v826 = vunpack.c.l.b16 %v200
    %v827 = vunpack.c.h.b16 %v200
    %v828 = vunpack.c.l.b16 %v201
    %v829 = vunpack.c.h.b16 %v201
    %v830 = vunpack.c.l.b16 %v202
    %v831 = vunpack.c.h.b16 %v202
    %v832 = vunpack.c.l.b16 %v203
    %v833 = vunpack.c.h.b16 %v203
    %v834 = vunpack.c.l.b16 %v204
    %v835 = vunpack.c.h.b16 %v204
    %v836 = vunpack.c.l.b16 %v205
    %v837 = vunpack.c.h.b16 %v205
    %v838 = vunpack.c.l.b16 %v206
    %v839 = vunpack.c.h.b16 %v206
    %v840 = vunpack.c.l.b16 %v207
    %v841 = vunpack.c.h.b16 %v207
    %v842 = vunpack.c.l.b16 %v208
    %v843 = vunpack.c.h.b16 %v208
    %v844 = vunpack.c.l.b16 %v209
    %v845 = vunpack.c.h.b16 %v209
    %v846 = vunpack.c.l.b16 %v210
    %v847 = vunpack.c.h.b16 %v210
    %v848 = vunpack.c.l.b16 %v211
    %v849 = vunpack.c.h.b16 %v211
    %v850 = vunpack.c.l.b16 %v212
    %v851 = vunpack.c.h.b16 %v212
    %v852 = vunpack.c.l.b16 %v213
    %v853 = vunpack.c.h.b16 %v213
    %v854 = vunpack.c.l.b16 %v214
    %v855 = vunpack.c.h.b16 %v214
    %v856 = vunpack.c.l.b16 %v215
    %v857 = vunpack.c.h.b16 %v215
    %v858 = vunpack.c.l.b16 %v216
    %v859 = vunpack.c.h.b16 %v216
    %v860 = vunpack.c.l.b16 %v217
    %v861 = vunpack.c.h.b16 %v217
    %v862 = vunpack.c.l.b16 %v218
    %v863 = vunpack.c.h.b16 %v218
    %v864 = vunpack.c.l.b16 %v219
    %v865 = vunpack.c.h.b16 %v219
    %v866 = vunpack.c.l.b16 %v220
    %v867 = vunpack.c.h.b16 %v220
    %v868 = vunpack.c.l.b16 %v221
    %v869 = vunpack.c.h.b16 %v221
    %v870 = vunpack.c.l.b16 %v222
    %v871 = vunpack.c.h.b16 %v222
    %v872 = vunpack.c.l.b16 %v223
    %v873 = vunpack.c.h.b16 %v223
    %v874 = vunpack.c.l.b16 %v224
    %v875 = vunpack.c.h.b16 %v224
    %v876 = vunpack.c.l.b16 %v225
    %v877 = vunpack.c.h.b16 %v225
    %v878 = vunpack.c.l.b16 %v226
    %v879 = vunpack.c.h.b16 %v226
    %v880 = vunpack.c.l.b16 %v227
    %v881 = vunpack.c.h.b16 %v227
    %v882 = vunpack.c.l.b16 %v228
    %v883 = vunpack.c.h.b16 %v228
    %v884 = vunpack.c.l.b16 %v229
    %v885 = vunpack.c.h.b16 %v229
    %v886 = vunpack.c.l.b16 %v230
    %v887 = vunpack.c.h.b16 %v230
    %v888 = vunpack.c.l.b16 %v231
    %v889 = vunpack.c.h.b16 %v231
    %v890 = vunpack.c.l.b16 %v232
    %v891 = vunpack.c.h.b16 %v232
    %v892 = vunpack.c.l.b16 %v233
    %v893 = vunpack.c.h.b16 %v233
    %v894 = vunpack.c.l.b16 %v234
    %v895 = vunpack.c.h.b16 %v234
    %v896 = vunpack.c.l.b16 %v235
    %v897 = vunpack.c.h.b16 %v235
    %v898 = vunpack.c.l.b16 %v236
    %v899 = vunpack.c.h.b16 %v236
    %v900 = vunpack.c.l.b16 %v237
    %v901 = vunpack.c.h.b16 %v237
    %v902 = vunpack.c.l.b16 %v238
    %v903 = vunpack.c.h.b16 %v238
    %v904 = vunpack.c.l.b16 %v239
    %v905 = vunpack.c.h.b16 %v239
    %v906 = vunpack.c.l.b16 %v240
    %v907 = vunpack.c.h.b16 %v240
    %v908 = vunpack.c.l.b16 %v241
    %v909 = vunpack.c.h.b16 %v241
    %v910 = vunpack.c.l.b16 %v242
    %v911 = vunpack.c.h.b16 %v242
    %v912 = vunpack.c.l.b16 %v243
    %v913 = vunpack.c.h.b16 %v243
    %v914 = vunpack.c.l.b16 %v244
    %v915 = vunpack.c.h.b16 %v244
    %v916 = vunpack.c.l.b16 %v245
    %v917 = vunpack.c.h.b16 %v245
    %v918 = vunpack.c.l.b16 %v246
    %v919 = vunpack.c.h.b16 %v246
    %v920 = vunpack.c.l.b16 %v247
    %v921 = vunpack.c.h.b16 %v247
    %v922 = vunpack.c.l.b16 %v248
    %v923 = vunpack.c.h.b16 %v248
    %v924 = vunpack.c.l.b16 %v249
    %v925 = vunpack.c.h.b16 %v249
    %v926 = vunpack.c.l.b16 %v250
    %v927 = vunpack.c.h.b16 %v250
    %v928 = vunpack.c.l.b16 %v251
    %v929 = vunpack.c.h.b16 %v251
    %v930 = vunpack.c.l.b16 %v252
    %v931 = vunpack.c.h.b16 %v252
    %v932 = vunpack.c.l.b16 %v253
    %v933 = vunpack.c.h.b16 %v253
    %v934 = vunpack.c.l.b16 %v254
    %v935 = vunpack.c.h.b16 %v254
    %v936 = vunpack.c.l.b16 %v255
    %v937 = vunpack.c.h.b16 %v255
    %v938 = vunpack.c.l.b16 %v256
    %v939 = vunpack.c.h.b16 %v256
    %v940 = vunpack.c.l.b16 %v257
    %v941 = vunpack.c.h.b16 %v257
    %v942 = vunpack.c.l.b16 %v258
    %v943 = vunpack.c.h.b16 %v258
    %v944 = vunpack.c.l.b16 %v259
    %v945 = vunpack.c.h.b16 %v259
    %v946 = vunpack.c.l.b16 %v260
    %v947 = vunpack.c.h.b16 %v260
    %v948 = vunpack.c.l.b16 %v261
    %v949 = vunpack.c.h.b16 %v261
    %v950 = vunpack.c.l.b16 %v262
    %v951 = vunpack.c.h.b16 %v262
    %v952 = vunpack.c.l.b16 %v263
    %v953 = vunpack.c.h.b16 %v263
    %v954 = vunpack.c.l.b16 %v264
    %v955 = vunpack.c.h.b16 %v264
    %v956 = vunpack.c.l.b16 %v265
    %v957 = vunpack.c.h.b16 %v265
    %v958 = vunpack.c.l.b16 %v266
    %v959 = vunpack.c.h.b16 %v266
    %v960 = vunpack.c.l.b16 %v267
    %v961 = vunpack.c.h.b16 %v267
    %v962 = vunpack.c.l.b16 %v268
    %v963 = vunpack.c.h.b16 %v268
    %v964 = vunpack.c.l.b16 %v269
    %v965 = vunpack.c.h.b16 %v269
    %v966 = vunpack.c.l.b16 %v270
    %v967 = vunpack.c.h.b16 %v270
    %v968 = vunpack.c.l.b16 %v271
    %v969 = vunpack.c.h.b16 %v271
    %v970 = vunpack.c.l.b16 %v272
    %v971 = vunpack.c.h.b16 %v272
    %v972 = vunpack.c.l.b16 %v273
    %v973 = vunpack.c.h.b16 %v273
    %v974 = vunpack.c.l.b16 %v274
    %v975 = vunpack.c.h.b16 %v274
    %v976 = vunpack.c.l.b16 %v275
    %v977 = vunpack.c.h.b16 %v275
    %v978 = vunpack.c.l.b16 %v276
    %v979 = vunpack.c.h.b16 %v276
    %v980 = vunpack.c.l.b16 %v277
    %v981 = vunpack.c.h.b16 %v277
    %v982 = vunpack.c.l.b16 %v278
    %v983 = vunpack.c.h.b16 %v278
    %v984 = vunpack.c.l.b16 %v279
    %v985 = vunpack.c.h.b16 %v279
    %v986 = vunpack.c.l.b16 %v280
    %v987 = vunpack.c.h.b16 %v280
    %v988 = vunpack.c.l.b16 %v281
    %v989 = vunpack.c.h.b16 %v281
    %v990 = vunpack.c.l.b16 %v282
    %v991 = vunpack.c.h.b16 %v282
    %v992 = vunpack.c.l.b16 %v283
    %v993 = vunpack.c.h.b16 %v283
    %v994 = vunpack.c.l.b16 %v284
    %v995 = vunpack.c.h.b16 %v284
    %v996 = vunpack.c.l.b16 %v285
    %v997 = vunpack.c.h.b16 %v285
    %v998 = vunpack.c.l.b16 %v286
    %v999 = vunpack.c.h.b16 %v286
    %v1000 = vunpack.c.l.b16 %v287
    %v1001 = vunpack.c.h.b16 %v287
    %v1002 = vunpack.c.l.b16 %v288
    %v1003 = vunpack.c.h.b16 %v288
    %v1004 = vunpack.c.l.b16 %v289
    %v1005 = vunpack.c.h.b16 %v289
    %v1006 = vunpack.c.l.b16 %v290
    %v1007 = vunpack.c.h.b16 %v290
    %v1008 = vunpack.c.l.b16 %v291
    %v1009 = vunpack.c.h.b16 %v291
    %v1010 = vunpack.c.l.b16 %v292
    %v1011 = vunpack.c.h.b16 %v292
    %v1012 = vunpack.c.l.b16 %v293
    %v1013 = vunpack.c.h.b16 %v293
    %v1014 = vunpack.c.l.b16 %v294
    %v1015 = vunpack.c.h.b16 %v294
    %v1016 = vunpack.c.l.b16 %v295
    %v1017 = vunpack.c.h.b16 %v295
    %v1018 = vunpack.c.l.b16 %v296
    %v1019 = vunpack.c.h.b16 %v296
    %v1020 = vunpack.c.l.b16 %v297
    %v1021 = vunpack.c.h.b16 %v297
    %v1022 = vunpack.c.l.b16 %v298
    %v1023 = vunpack.c.h.b16 %v298
    %v1024 = vunpack.c.l.b16 %v299
    %v1025 = vunpack.c.h.b16 %v299
    %v1026 = vunpack.c.l.b16 %v300
    %v1027 = vunpack.c.h.b16 %v300
    %v1028 = vunpack.c.l.b16 %v301
    %v1029 = vunpack.c.h.b16 %v301
    %v1030 = vunpack.c.l.b16 %v302
    %v1031 = vunpack.c.h.b16 %v302
    %v1032 = vunpack.c.l.b16 %v303
    %v1033 = vunpack.c.h.b16 %v303
    %v1034 = vunpack.c.l.b16 %v304
    %v1035 = vunpack.c.h.b16 %v304
    %v1036 = vunpack.c.l.b16 %v305
    %v1037 = vunpack.c.h.b16 %v305
    %v1038 = vunpack.c.l.b16 %v306
    %v1039 = vunpack.c.h.b16 %v306
    %v1040 = vunpack.c.l.b16 %v307
    %v1041 = vunpack.c.h.b16 %v307
    %v1042 = vunpack.c.l.b16 %v308
    %v1043 = vunpack.c.h.b16 %v308
    %v1044 = vunpack.c.l.b16 %v309
    %v1045 = vunpack.c.h.b16 %v309
    %v1046 = vunpack.c.l.b16 %v310
    %v1047 = vunpack.c.h.b16 %v310
    %v1048 = vunpack.c.l.b16 %v311
    %v1049 = vunpack.c.h.b16 %v311
    %v1050 = vunpack.c.l.b16 %v312
    %v1051 = vunpack.c.h.b16 %v312
    %v1052 = vunpack.c.l.b16 %v313
    %v1053 = vunpack.c.h.b16 %v313
    %v1054 = vunpack.c.l.b16 %v314
    %v1055 = vunpack.c.h.b16 %v314
    %v1056 = vunpack.c.l.b16 %v315
    %v1057 = vunpack.c.h.b16 %v315
    %v1058 = vunpack.c.l.b16 %v316
    %v1059 = vunpack.c.h.b16 %v316
    %v1060 = vunpack.c.l.b16 %v317
    %v1061 = vunpack.c.h.b16 %v317
    %v1062 = vunpack.c.l.b16 %v318
    %v1063 = vunpack.c.h.b16 %v318
    %v1064 = vunpack.c.l.b16 %v319
    %v1065 = vunpack.c.h.b16 %v319
    %v1066 = vunpack.c.l.b16 %v320
    %v1067 = vunpack.c.h.b16 %v320
    %v1068 = vunpack.c.l.b16 %v321
    %v1069 = vunpack.c.h.b16 %v321
    %v1070 = vunpack.c.l.b16 %v322
    %v1071 = vunpack.c.h.b16 %v322
    %v1072 = vunpack.c.l.b16 %v323
    %v1073 = vunpack.c.h.b16 %v323
    %v1074 = vunpack.c.l.b16 %v324
    %v1075 = vunpack.c.h.b16 %v324
    %v1076 = vunpack.c.l.b16 %v325
    %v1077 = vunpack.c.h.b16 %v325
    %v1078 = vunpack.c.l.b16 %v326
    %v1079 = vunpack.c.h.b16 %v326
    %v1080 = vunpack.c.l.b16 %v327
    %v1081 = vunpack.c.h.b16 %v327
    %v1082 = vunpack.c.l.b16 %v328
    %v1083 = vunpack.c.h.b16 %v328
    %v1084 = vunpack.c.l.b16 %v329
    %v1085 = vunpack.c.h.b16 %v329
    %v1086 = vunpack.c.l.b16 %v330
    %v1087 = vunpack.c.h.b16 %v330
    %v1088 = vunpack.c.l.b16 %v331
    %v1089 = vunpack.c.h.b16 %v331
    %v1090 = vunpack.c.l.b16 %v332
    %v1091 = vunpack.c.h.b16 %v332
    %v1092 = vunpack.c.l.b16 %v333
    %v1093 = vunpack.c.h.b16 %v333
    %v1094 = vunpack.c.l.b16 %v334
    %v1095 = vunpack.c.h.b16 %v334
    %v1096 = vunpack.c.l.b16 %v335
    %v1097 = vunpack.c.h.b16 %v335
    %v1098 = vunpack.c.l.b16 %v336
    %v1099 = vunpack.c.h.b16 %v336
    %v1100 = vunpack.c.l.b16 %v337
    %v1101 = vunpack.c.h.b16 %v337
    %v1102 = vunpack.c.l.b16 %v338
    %v1103 = vunpack.c.h.b16 %v338
    %v1104 = vunpack.c.l.b16 %v339
    %v1105 = vunpack.c.h.b16 %v339
    %v1106 = vunpack.c.l.b16 %v340
    %v1107 = vunpack.c.h.b16 %v340
    %v1108 = vunpack.c.l.b16 %v341
    %v1109 = vunpack.c.h.b16 %v341
    %v1110 = vunpack.c.l.b16 %v342
    %v1111 = vunpack.c.h.b16 %v342
    %v1112 = vunpack.c.l.b16 %v343
    %v1113 = vunpack.c.h.b16 %v343
    %v1114 = vunpack.c.l.b16 %v344
    %v1115 = vunpack.c.h.b16 %v344
    %v1116 = vunpack.c.l.b16 %v345
    %v1117 = vunpack.c.h.b16 %v345
    %v1118 = vunpack.c.l.b16 %v346
    %v1119 = vunpack.c.h.b16 %v346
    %v1120 = vunpack.c.l.b16 %v347
    %v1121 = vunpack.c.h.b16 %v347
    %v1122 = vunpack.c.l.b16 %v348
    %v1123 = vunpack.c.h.b16 %v348
    %v1124 = vunpack.c.l.b16 %v349
    %v1125 = vunpack.c.h.b16 %v349
    %v1126 = vunpack.c.l.b16 %v350
    %v1127 = vunpack.c.h.b16 %v350
    %v1128 = vunpack.c.l.b16 %v351
    %v1129 = vunpack.c.h.b16 %v351
    %v1130 = vunpack.c.l.b16 %v352
    %v1131 = vunpack.c.h.b16 %v352
    %v1132 = vunpack.c.l.b16 %v353
    %v1133 = vunpack.c.h.b16 %v353
    %v1134 = vunpack.c.l.b16 %v354
    %v1135 = vunpack.c.h.b16 %v354
    %v1136 = vunpack.c.l.b16 %v355
    %v1137 = vunpack.c.h.b16 %v355
    %v1138 = vunpack.c.l.b16 %v356
    %v1139 = vunpack.c.h.b16 %v356
    %v1140 = vunpack.c.l.b16 %v357
    %v1141 = vunpack.c.h.b16 %v357
    %v1142 = vunpack.c.l.b16 %v358
    %v1143 = vunpack.c.h.b16 %v358
    %v1144 = vunpack.c.l.b16 %v359
    %v1145 = vunpack.c.h.b16 %v359
    %v1146 = vunpack.c.l.b16 %v360
    %v1147 = vunpack.c.h.b16 %v360
    %v1148 = vunpack.c.l.b16 %v361
    %v1149 = vunpack.c.h.b16 %v361
    %v1150 = vunpack.c.l.b16 %v362
    %v1151 = vunpack.c.h.b16 %v362
    %v1152 = vunpack.c.l.b16 %v363
    %v1153 = vunpack.c.h.b16 %v363
    %v1154 = vpack.c.b16 %v646, %v642
    %v1155 = vpack.c.b16 %v647, %v643
    %v1156 = vpack.c.b16 %v648, %v644
    %v1157 = vpack.c.b16 %v649, %v645
    %v1158 = vpack.c.b16 %v654, %v650
    %v1159 = vpack.c.b16 %v655, %v651
    %v1160 = vpack.c.b16 %v656, %v652
    %v1161 = vpack.c.b16 %v657, %v653
    %v1162 = vpack.c.b16 %v662, %v658
    %v1163 = vpack.c.b16 %v663, %v659
    %v1164 = vpack.c.b16 %v664, %v660
    %v1165 = vpack.c.b16 %v665, %v661
    %v1166 = vpack.c.b16 %v670, %v666
    %v1167 = vpack.c.b16 %v671, %v667
    %v1168 = vpack.c.b16 %v672, %v668
    %v1169 = vpack.c.b16 %v673, %v669
    %v1170 = vpack.c.b16 %v678, %v674
    %v1171 = vpack.c.b16 %v679, %v675
    %v1172 = vpack.c.b16 %v680, %v676
    %v1173 = vpack.c.b16 %v681, %v677
    %v1174 = vpack.c.b16 %v686, %v682
    %v1175 = vpack.c.b16 %v687, %v683
    %v1176 = vpack.c.b16 %v688, %v684
    %v1177 = vpack.c.b16 %v689, %v685
    %v1178 = vpack.c.b16 %v694, %v690
    %v1179 = vpack.c.b16 %v695, %v691
    %v1180 = vpack.c.b16 %v696, %v692
    %v1181 = vpack.c.b16 %v697, %v693
    %v1182 = vpack.c.b16 %v702, %v698
    %v1183 = vpack.c.b16 %v703, %v699
    %v1184 = vpack.c.b16 %v704, %v700
    %v1185 = vpack.c.b16 %v705, %v701
    %v1186 = vpack.c.b16 %v710, %v706
    %v1187 = vpack.c.b16 %v711, %v707
    %v1188 = vpack.c.b16 %v712, %v708
    %v1189 = vpack.c.b16 %v713, %v709
    %v1190 = vpack.c.b16 %v718, %v714
    %v1191 = vpack.c.b16 %v719, %v715
    %v1192 = vpack.c.b16 %v720, %v716
    %v1193 = vpack.c.b16 %v721, %v717
    %v1194 = vpack.c.b16 %v726, %v722
    %v1195 = vpack.c.b16 %v727, %v723
    %v1196 = vpack.c.b16 %v728, %v724
    %v1197 = vpack.c.b16 %v729, %v725
    %v1198 = vpack.c.b16 %v734, %v730
    %v1199 = vpack.c.b16 %v735, %v731
    %v1200 = vpack.c.b16 %v736, %v732
    %v1201 = vpack.c.b16 %v737, %v733
    %v1202 = vpack.c.b16 %v742, %v738
    %v1203 = vpack.c.b16 %v743, %v739
    %v1204 = vpack.c.b16 %v744, %v740
    %v1205 = vpack.c.b16 %v745, %v741
    %v1206 = vpack.c.b16 %v750, %v746
    %v1207 = vpack.c.b16 %v751, %v747
    %v1208 = vpack.c.b16 %v752, %v748
    %v1209 = vpack.c.b16 %v753, %v749
    %v1210 = vpack.c.b16 %v758, %v754
    %v1211 = vpack.c.b16 %v759, %v755
    %v1212 = vpack.c.b16 %v760, %v756
    %v1213 = vpack.c.b16 %v761, %v757
    %v1214 = vpack.c.b16 %v766, %v762
    %v1215 = vpack.c.b16 %v767, %v763
    %v1216 = vpack.c.b16 %v768, %v764
    %v1217 = vpack.c.b16 %v769, %v765
    %v1218 = vpack.c.b16 %v774, %v770
    %v1219 = vpack.c.b16 %v775, %v771
    %v1220 = vpack.c.b16 %v776, %v772
    %v1221 = vpack.c.b16 %v777, %v773
    %v1222 = vpack.c.b16 %v782, %v778
    %v1223 = vpack.c.b16 %v783, %v779
    %v1224 = vpack.c.b16 %v784, %v780
    %v1225 = vpack.c.b16 %v785, %v781
    %v1226 = vpack.c.b16 %v790, %v786
    %v1227 = vpack.c.b16 %v791, %v787
    %v1228 = vpack.c.b16 %v792, %v788
    %v1229 = vpack.c.b16 %v793, %v789
    %v1230 = vpack.c.b16 %v798, %v794
    %v1231 = vpack.c.b16 %v799, %v795
    %v1232 = vpack.c.b16 %v800, %v796
    %v1233 = vpack.c.b16 %v801, %v797
    %v1234 = vpack.c.b16 %v806, %v802
    %v1235 = vpack.c.b16 %v807, %v803
    %v1236 = vpack.c.b16 %v808, %v804
    %v1237 = vpack.c.b16 %v809, %v805
    %v1238 = vpack.c.b16 %v814, %v810
    %v1239 = vpack.c.b16 %v815, %v811
    %v1240 = vpack.c.b16 %v816, %v812
    %v1241 = vpack.c.b16 %v817, %v813
    %v1242 = vpack.c.b16 %v822, %v818
    %v1243 = vpack.c.b16 %v823, %v819
    %v1244 = vpack.c.b16 %v824, %v820
    %v1245 = vpack.c.b16 %v825, %v821
    %v1246 = vpack.c.b16 %v830, %v826
    %v1247 = vpack.c.b16 %v831, %v827
    %v1248 = vpack.c.b16 %v832, %v828
    %v1249 = vpack.c.b16 %v833, %v829
    %v1250 = vpack.c.b16 %v838, %v834
    %v1251 = vpack.c.b16 %v839, %v835
    %v1252 = vpack.c.b16 %v840, %v836
    %v1253 = vpack.c.b16 %v841, %v837
    %v1254 = vpack.c.b16 %v846, %v842
    %v1255 = vpack.c.b16 %v847, %v843
    %v1256 = vpack.c.b16 %v848, %v844
    %v1257 = vpack.c.b16 %v849, %v845
    %v1258 = vpack.c.b16 %v854, %v850
    %v1259 = vpack.c.b16 %v855, %v851
    %v1260 = vpack.c.b16 %v856, %v852
    %v1261 = vpack.c.b16 %v857, %v853
    %v1262 = vpack.c.b16 %v862, %v858
    %v1263 = vpack.c.b16 %v863, %v859
    %v1264 = vpack.c.b16 %v864, %v860
    %v1265 = vpack.c.b16 %v865, %v861
    %v1266 = vpack.c.b16 %v870, %v866
    %v1267 = vpack.c.b16 %v871, %v867
    %v1268 = vpack.c.b16 %v872, %v868
    %v1269 = vpack.c.b16 %v873, %v869
    %v1270 = vpack.c.b16 %v878, %v874
    %v1271 = vpack.c.b16 %v879, %v875
    %v1272 = vpack.c.b16 %v880, %v876
    %v1273 = vpack.c.b16 %v881, %v877
    %v1274 = vpack.c.b16 %v886, %v882
    %v1275 = vpack.c.b16 %v887, %v883
    %v1276 = vpack.c.b16 %v888, %v884
    %v1277 = vpack.c.b16 %v889, %v885
    %v1278 = vpack.c.b16 %v894, %v890
    %v1279 = vpack.c.b16 %v895, %v891
    %v1280 = vpack.c.b16 %v896, %v892
    %v1281 = vpack.c.b16 %v897, %v893
    %v1282 = vpack.c.b16 %v902, %v898
    %v1283 = vpack.c.b16 %v903, %v899
    %v1284 = vpack.c.b16 %v904, %v900
    %v1285 = vpack.c.b16 %v905, %v901
    %v1286 = vpack.c.b16 %v910, %v906
    %v1287 = vpack.c.b16 %v911, %v907
    %v1288 = vpack.c.b16 %v912, %v908
    %v1289 = vpack.c.b16 %v913, %v909
    %v1290 = vpack.c.b16 %v918, %v914
    %v1291 = vpack.c.b16 %v919, %v915
    %v1292 = vpack.c.b16 %v920, %v916
    %v1293 = vpack.c.b16 %v921, %v917
    %v1294 = vpack.c.b16 %v926, %v922
    %v1295 = vpack.c.b16 %v927, %v923
    %v1296 = vpack.c.b16 %v928, %v924
    %v1297 = vpack.c.b16 %v929, %v925
    %v1298 = vpack.c.b16 %v934, %v930
    %v1299 = vpack.c.b16 %v935, %v931
    %v1300 = vpack.c.b16 %v936, %v932
    %v1301 = vpack.c.b16 %v937, %v933
    %v1302 = vpack.c.b16 %v942, %v938
    %v1303 = vpack.c.b16 %v943, %v939
    %v1304 = vpack.c.b16 %v944, %v940
    %v1305 = vpack.c.b16 %v945, %v941
    %v1306 = vpack.c.b16 %v950, %v946
    %v1307 = vpack.c.b16 %v951, %v947
    %v1308 = vpack.c.b16 %v952, %v948
    %v1309 = vpack.c.b16 %v953, %v949
    %v1310 = vpack.c.b16 %v958, %v954
    %v1311 = vpack.c.b16 %v959, %v955
    %v1312 = vpack.c.b16 %v960, %v956
    %v1313 = vpack.c.b16 %v961, %v957
    %v1314 = vpack.c.b16 %v966, %v962
    %v1315 = vpack.c.b16 %v967, %v963
    %v1316 = vpack.c.b16 %v968, %v964
    %v1317 = vpack.c.b16 %v969, %v965
    %v1318 = vpack.c.b16 %v974, %v970
    %v1319 = vpack.c.b16 %v975, %v971
    %v1320 = vpack.c.b16 %v976, %v972
    %v1321 = vpack.c.b16 %v977, %v973
    %v1322 = vpack.c.b16 %v982, %v978
    %v1323 = vpack.c.b16 %v983, %v979
    %v1324 = vpack.c.b16 %v984, %v980
    %v1325 = vpack.c.b16 %v985, %v981
    %v1326 = vpack.c.b16 %v990, %v986
    %v1327 = vpack.c.b16 %v991, %v987
    %v1328 = vpack.c.b16 %v992, %v988
    %v1329 = vpack.c.b16 %v993, %v989
    %v1330 = vpack.c.b16 %v998, %v994
    %v1331 = vpack.c.b16 %v999, %v995
    %v1332 = vpack.c.b16 %v1000, %v996
    %v1333 = vpack.c.b16 %v1001, %v997
    %v1334 = vpack.c.b16 %v1006, %v1002
    %v1335 = vpack.c.b16 %v1007, %v1003
    %v1336 = vpack.c.b16 %v1008, %v1004
    %v1337 = vpack.c.b16 %v1009, %v1005
    %v1338 = vpack.c.b16 %v1014, %v1010
    %v1339 = vpack.c.b16 %v1015, %v1011
    %v1340 = vpack.c.b16 %v1016, %v1012
    %v1341 = vpack.c.b16 %v1017, %v1013
    %v1342 = vpack.c.b16 %v1022, %v1018
    %v1343 = vpack.c.b16 %v1023, %v1019
    %v1344 = vpack.c.b16 %v1024, %v1020
    %v1345 = vpack.c.b16 %v1025, %v1021
    %v1346 = vpack.c.b16 %v1030, %v1026
    %v1347 = vpack.c.b16 %v1031, %v1027
    %v1348 = vpack.c.b16 %v1032, %v1028
    %v1349 = vpack.c.b16 %v1033, %v1029
    %v1350 = vpack.c.b16 %v1038, %v1034
    %v1351 = vpack.c.b16 %v1039, %v1035
    %v1352 = vpack.c.b16 %v1040, %v1036
    %v1353 = vpack.c.b16 %v1041, %v1037
    %v1354 = vpack.c.b16 %v1046, %v1042
    %v1355 = vpack.c.b16 %v1047, %v1043
    %v1356 = vpack.c.b16 %v1048, %v1044
    %v1357 = vpack.c.b16 %v1049, %v1045
    %v1358 = vpack.c.b16 %v1054, %v1050
    %v1359 = vpack.c.b16 %v1055, %v1051
    %v1360 = vpack.c.b16 %v1056, %v1052
    %v1361 = vpack.c.b16 %v1057, %v1053
    %v1362 = vpack.c.b16 %v1062, %v1058
    %v1363 = vpack.c.b16 %v1063, %v1059
    %v1364 = vpack.c.b16 %v1064, %v1060
    %v1365 = vpack.c.b16 %v1065, %v1061
    %v1366 = vpack.c.b16 %v1070, %v1066
    %v1367 = vpack.c.b16 %v1071, %v1067
    %v1368 = vpack.c.b16 %v1072, %v1068
    %v1369 = vpack.c.b16 %v1073, %v1069
    %v1370 = vpack.c.b16 %v1078, %v1074
    %v1371 = vpack.c.b16 %v1079, %v1075
    %v1372 = vpack.c.b16 %v1080, %v1076
    %v1373 = vpack.c.b16 %v1081, %v1077
    %v1374 = vpack.c.b16 %v1086, %v1082
    %v1375 = vpack.c.b16 %v1087, %v1083
    %v1376 = vpack.c.b16 %v1088, %v1084
    %v1377 = vpack.c.b16 %v1089, %v1085
    %v1378 = vpack.c.b16 %v1094, %v1090
    %v1379 = vpack.c.b16 %v1095, %v1091
    %v1380 = vpack.c.b16 %v1096, %v1092
    %v1381 = vpack.c.b16 %v1097, %v1093
    %v1382 = vpack.c.b16 %v1102, %v1098
    %v1383 = vpack.c.b16 %v1103, %v1099
    %v1384 = vpack.c.b16 %v1104, %v1100
    %v1385 = vpack.c.b16 %v1105, %v1101
    %v1386 = vpack.c.b16 %v1110, %v1106
    %v1387 = vpack.c.b16 %v1111, %v1107
    %v1388 = vpack.c.b16 %v1112, %v1108
    %v1389 = vpack.c.b16 %v1113, %v1109
    %v1390 = vpack.c.b16 %v1118, %v1114
    %v1391 = vpack.c.b16 %v1119, %v1115
    %v1392 = vpack.c.b16 %v1120, %v1116
    %v1393 = vpack.c.b16 %v1121, %v1117
    %v1394 = vpack.c.b16 %v1126, %v1122
    %v1395 = vpack.c.b16 %v1127, %v1123
    %v1396 = vpack.c.b16 %v1128, %v1124
    %v1397 = vpack.c.b16 %v1129, %v1125
    %v1398 = vpack.c.b16 %v1134, %v1130
    %v1399 = vpack.c.b16 %v1135, %v1131
    %v1400 = vpack.c.b16 %v1136, %v1132
    %v1401 = vpack.c.b16 %v1137, %v1133
    %v1402 = vpack.c.b16 %v1142, %v1138
    %v1403 = vpack.c.b16 %v1143, %v1139
    %v1404 = vpack.c.b16 %v1144, %v1140
    %v1405 = vpack.c.b16 %v1145, %v1141
    %v1406 = vpack.c.b16 %v1150, %v1146
    %v1407 = vpack.c.b16 %v1151, %v1147
    %v1408 = vpack.c.b16 %v1152, %v1148
    %v1409 = vpack.c.b16 %v1153, %v1149
    %1666 = vmatprep.subr.bf16.mxu0 %v1183
    %1667 = vmatpush1.bf16.msra.mxu0 %v1182
    %1668 = vmatprep.subr.bf16.mxu0 %v1179
    %1669 = vmatpush1.bf16.msra.mxu0 %v1178
    %1670 = vmatprep.subr.bf16.mxu0 %v1175
    %1671 = vmatpush1.bf16.msra.mxu0 %v1174
    %1672 = vmatprep.subr.bf16.mxu0 %v1171
    %1673 = vmatpush1.bf16.msra.mxu0 %v1170
    %1674 = vmatprep.subr.bf16.mxu0 %v1167
    %1675 = vmatpush1.bf16.msra.mxu0 %v1166
    %1676 = vmatprep.subr.bf16.mxu0 %v1163
    %1677 = vmatpush1.bf16.msra.mxu0 %v1162
    %1678 = vmatprep.subr.bf16.mxu0 %v1159
    %1679 = vmatpush1.bf16.msra.mxu0 %v1158
    %1680 = vmatprep.subr.bf16.mxu0 %v1155
    %1681 = vmatpush1.bf16.msra.mxu0 %v1154
    %1682 = vmatprep.subr.bf16.mxu0 %v1215
    %1683 = vmatpush2.bf16.msra.mxu0 %v1214
    %1684 = vmatprep.subr.bf16.mxu0 %v1211
    %1685 = vmatpush2.bf16.msra.mxu0 %v1210
    %1686 = vmatprep.subr.bf16.mxu0 %v1207
    %1687 = vmatpush2.bf16.msra.mxu0 %v1206
    %1688 = vmatprep.subr.bf16.mxu0 %v1203
    %1689 = vmatpush2.bf16.msra.mxu0 %v1202
    %1690 = vmatprep.subr.bf16.mxu0 %v1199
    %1691 = vmatpush2.bf16.msra.mxu0 %v1198
    %1692 = vmatprep.subr.bf16.mxu0 %v1195
    %1693 = vmatpush2.bf16.msra.mxu0 %v1194
    %1694 = vmatprep.subr.bf16.mxu0 %v1191
    %1695 = vmatpush2.bf16.msra.mxu0 %v1190
    %1696 = vmatprep.subr.bf16.mxu0 %v1187
    %1697 = vmatpush2.bf16.msra.mxu0 %v1186
    %1698 = vmatprep.mubr.bf16.mxu0 %v101
    %1699 = vmatmul.mubr.bf16.gmra.mxu0 %v100
    %v1700 = vpop.f32.mrf.mxu0
    %v1701 = vadd.f32 %v369, %v1700
    %v1702 = vpop.f32.mrf.mxu0
    %v1703 = vadd.f32 %v373, %v1702
    %v1704 = vpop.f32.mrf.mxu0
    %v1705 = vpop.f32.mrf.mxu0
    %1706 = vdwg.mxu0
    %1707 = vmatprep.subr.bf16.mxu0 %v1247
    %1708 = vmatpush1.bf16.msra.mxu0 %v1246
    %1709 = vmatprep.subr.bf16.mxu0 %v1243
    %1710 = vmatpush1.bf16.msra.mxu0 %v1242
    %1711 = vmatprep.subr.bf16.mxu0 %v1239
    %1712 = vmatpush1.bf16.msra.mxu0 %v1238
    %1713 = vmatprep.subr.bf16.mxu0 %v1235
    %1714 = vmatpush1.bf16.msra.mxu0 %v1234
    %1715 = vmatprep.subr.bf16.mxu0 %v1231
    %1716 = vmatpush1.bf16.msra.mxu0 %v1230
    %1717 = vmatprep.subr.bf16.mxu0 %v1227
    %1718 = vmatpush1.bf16.msra.mxu0 %v1226
    %1719 = vmatprep.subr.bf16.mxu0 %v1223
    %1720 = vmatpush1.bf16.msra.mxu0 %v1222
    %1721 = vmatprep.subr.bf16.mxu0 %v1219
    %1722 = vmatpush1.bf16.msra.mxu0 %v1218
    %1723 = vmatprep.subr.bf16.mxu0 %v1279
    %1724 = vmatpush2.bf16.msra.mxu0 %v1278
    %1725 = vmatprep.subr.bf16.mxu0 %v1275
    %1726 = vmatpush2.bf16.msra.mxu0 %v1274
    %1727 = vmatprep.subr.bf16.mxu0 %v1271
    %1728 = vmatpush2.bf16.msra.mxu0 %v1270
    %1729 = vmatprep.subr.bf16.mxu0 %v1267
    %1730 = vmatpush2.bf16.msra.mxu0 %v1266
    %1731 = vmatprep.subr.bf16.mxu0 %v1263
    %1732 = vmatpush2.bf16.msra.mxu0 %v1262
    %1733 = vmatprep.subr.bf16.mxu0 %v1259
    %1734 = vmatpush2.bf16.msra.mxu0 %v1258
    %1735 = vmatprep.subr.bf16.mxu0 %v1255
    %1736 = vmatpush2.bf16.msra.mxu0 %v1254
    %1737 = vmatprep.subr.bf16.mxu0 %v1251
    %1738 = vmatpush2.bf16.msra.mxu0 %v1250
    %1739 = vmatprep.mubr.bf16.mxu0 %v103
    %1740 = vmatmul.mubr.bf16.gmra.mxu0 %v102
    %v1741 = vpop.f32.mrf.mxu0
    %v1742 = vadd.f32 %v1701, %v1741
    %v1743 = vpop.f32.mrf.mxu0
    %v1744 = vadd.f32 %v1703, %v1743
    %v1745 = vpop.f32.mrf.mxu0
    %v1746 = vpop.f32.mrf.mxu0
    %1747 = vdwg.mxu0
    %1748 = vmatprep.subr.bf16.mxu0 %v1311
    %1749 = vmatpush1.bf16.msra.mxu0 %v1310
    %1750 = vmatprep.subr.bf16.mxu0 %v1307
    %1751 = vmatpush1.bf16.msra.mxu0 %v1306
    %1752 = vmatprep.subr.bf16.mxu0 %v1303
    %1753 = vmatpush1.bf16.msra.mxu0 %v1302
    %1754 = vmatprep.subr.bf16.mxu0 %v1299
    %1755 = vmatpush1.bf16.msra.mxu0 %v1298
    %1756 = vmatprep.subr.bf16.mxu0 %v1295
    %1757 = vmatpush1.bf16.msra.mxu0 %v1294
    %1758 = vmatprep.subr.bf16.mxu0 %v1291
    %1759 = vmatpush1.bf16.msra.mxu0 %v1290
    %1760 = vmatprep.subr.bf16.mxu0 %v1287
    %1761 = vmatpush1.bf16.msra.mxu0 %v1286
    %1762 = vmatprep.subr.bf16.mxu0 %v1283
    %1763 = vmatpush1.bf16.msra.mxu0 %v1282
    %1764 = vmatprep.subr.bf16.mxu0 %v1343
    %1765 = vmatpush2.bf16.msra.mxu0 %v1342
    %1766 = vmatprep.subr.bf16.mxu0 %v1339
    %1767 = vmatpush2.bf16.msra.mxu0 %v1338
    %1768 = vmatprep.subr.bf16.mxu0 %v1335
    %1769 = vmatpush2.bf16.msra.mxu0 %v1334
    %1770 = vmatprep.subr.bf16.mxu0 %v1331
    %1771 = vmatpush2.bf16.msra.mxu0 %v1330
    %1772 = vmatprep.subr.bf16.mxu0 %v1327
    %1773 = vmatpush2.bf16.msra.mxu0 %v1326
    %1774 = vmatprep.subr.bf16.mxu0 %v1323
    %1775 = vmatpush2.bf16.msra.mxu0 %v1322
    %1776 = vmatprep.subr.bf16.mxu0 %v1319
    %1777 = vmatpush2.bf16.msra.mxu0 %v1318
    %1778 = vmatprep.subr.bf16.mxu0 %v1315
    %1779 = vmatpush2.bf16.msra.mxu0 %v1314
    %1780 = vmatprep.mubr.bf16.mxu0 %v105
    %1781 = vmatmul.mubr.bf16.gmra.mxu0 %v104
    %v1782 = vpop.f32.mrf.mxu0
    %v1783 = vadd.f32 %v1742, %v1782
    %v1784 = vpop.f32.mrf.mxu0
    %v1785 = vadd.f32 %v1744, %v1784
    %v1786 = vpop.f32.mrf.mxu0
    %v1787 = vpop.f32.mrf.mxu0
    %1788 = vdwg.mxu0
    %1789 = vmatprep.subr.bf16.mxu0 %v1375
    %1790 = vmatpush1.bf16.msra.mxu0 %v1374
    %1791 = vmatprep.subr.bf16.mxu0 %v1371
    %1792 = vmatpush1.bf16.msra.mxu0 %v1370
    %1793 = vmatprep.subr.bf16.mxu0 %v1367
    %1794 = vmatpush1.bf16.msra.mxu0 %v1366
    %1795 = vmatprep.subr.bf16.mxu0 %v1363
    %1796 = vmatpush1.bf16.msra.mxu0 %v1362
    %1797 = vmatprep.subr.bf16.mxu0 %v1359
    %1798 = vmatpush1.bf16.msra.mxu0 %v1358
    %1799 = vmatprep.subr.bf16.mxu0 %v1355
    %1800 = vmatpush1.bf16.msra.mxu0 %v1354
    %1801 = vmatprep.subr.bf16.mxu0 %v1351
    %1802 = vmatpush1.bf16.msra.mxu0 %v1350
    %1803 = vmatprep.subr.bf16.mxu0 %v1347
    %1804 = vmatpush1.bf16.msra.mxu0 %v1346
    %1805 = vmatprep.subr.bf16.mxu0 %v1407
    %1806 = vmatpush2.bf16.msra.mxu0 %v1406
    %1807 = vmatprep.subr.bf16.mxu0 %v1403
    %1808 = vmatpush2.bf16.msra.mxu0 %v1402
    %1809 = vmatprep.subr.bf16.mxu0 %v1399
    %1810 = vmatpush2.bf16.msra.mxu0 %v1398
    %1811 = vmatprep.subr.bf16.mxu0 %v1395
    %1812 = vmatpush2.bf16.msra.mxu0 %v1394
    %1813 = vmatprep.subr.bf16.mxu0 %v1391
    %1814 = vmatpush2.bf16.msra.mxu0 %v1390
    %1815 = vmatprep.subr.bf16.mxu0 %v1387
    %1816 = vmatpush2.bf16.msra.mxu0 %v1386
    %1817 = vmatprep.subr.bf16.mxu0 %v1383
    %1818 = vmatpush2.bf16.msra.mxu0 %v1382
    %1819 = vmatprep.subr.bf16.mxu0 %v1379
    %1820 = vmatpush2.bf16.msra.mxu0 %v1378
    %1821 = vmatprep.mubr.bf16.mxu0 %v107
    %1822 = vmatmul.mubr.bf16.gmra.mxu0 %v106
    %v1823 = vpop.f32.mrf.mxu0
    %v1824 = vadd.f32 %v1783, %v1823
    %v1825 = vpop.f32.mrf.mxu0
    %v1826 = vadd.f32 %v1785, %v1825
    %v1827 = vpop.f32.mrf.mxu0
    %v1828 = vpop.f32.mrf.mxu0
    %1829 = vdwg.mxu0
    %1830 = vmatprep.subr.bf16.mxu0 %v1185
    %1831 = vmatpush1.bf16.msra.mxu0 %v1184
    %1832 = vmatprep.subr.bf16.mxu0 %v1181
    %1833 = vmatpush1.bf16.msra.mxu0 %v1180
    %1834 = vmatprep.subr.bf16.mxu0 %v1177
    %1835 = vmatpush1.bf16.msra.mxu0 %v1176
    %1836 = vmatprep.subr.bf16.mxu0 %v1173
    %1837 = vmatpush1.bf16.msra.mxu0 %v1172
    %1838 = vmatprep.subr.bf16.mxu0 %v1169
    %1839 = vmatpush1.bf16.msra.mxu0 %v1168
    %1840 = vmatprep.subr.bf16.mxu0 %v1165
    %1841 = vmatpush1.bf16.msra.mxu0 %v1164
    %1842 = vmatprep.subr.bf16.mxu0 %v1161
    %1843 = vmatpush1.bf16.msra.mxu0 %v1160
    %1844 = vmatprep.subr.bf16.mxu0 %v1157
    %1845 = vmatpush1.bf16.msra.mxu0 %v1156
    %1846 = vmatprep.subr.bf16.mxu0 %v1217
    %1847 = vmatpush2.bf16.msra.mxu0 %v1216
    %1848 = vmatprep.subr.bf16.mxu0 %v1213
    %1849 = vmatpush2.bf16.msra.mxu0 %v1212
    %1850 = vmatprep.subr.bf16.mxu0 %v1209
    %1851 = vmatpush2.bf16.msra.mxu0 %v1208
    %1852 = vmatprep.subr.bf16.mxu0 %v1205
    %1853 = vmatpush2.bf16.msra.mxu0 %v1204
    %1854 = vmatprep.subr.bf16.mxu0 %v1201
    %1855 = vmatpush2.bf16.msra.mxu0 %v1200
    %1856 = vmatprep.subr.bf16.mxu0 %v1197
    %1857 = vmatpush2.bf16.msra.mxu0 %v1196
    %1858 = vmatprep.subr.bf16.mxu0 %v1193
    %1859 = vmatpush2.bf16.msra.mxu0 %v1192
    %1860 = vmatprep.subr.bf16.mxu0 %v1189
    %1861 = vmatpush2.bf16.msra.mxu0 %v1188
    %1862 = vmatprep.mubr.bf16.mxu0 %v101
    %1863 = vmatmul.mubr.bf16.gmra.mxu0 %v100
    %v1864 = vpop.f32.mrf.mxu0
    %v1865 = vadd.f32 %v377, %v1864
    %v1866 = vpop.f32.mrf.mxu0
    %v1867 = vadd.f32 %v381, %v1866
    %v1868 = vpop.f32.mrf.mxu0
    %v1869 = vpop.f32.mrf.mxu0
    %1870 = vdwg.mxu0
    %1871 = vmatprep.subr.bf16.mxu0 %v1249
    %1872 = vmatpush1.bf16.msra.mxu0 %v1248
    %1873 = vmatprep.subr.bf16.mxu0 %v1245
    %1874 = vmatpush1.bf16.msra.mxu0 %v1244
    %1875 = vmatprep.subr.bf16.mxu0 %v1241
    %1876 = vmatpush1.bf16.msra.mxu0 %v1240
    %1877 = vmatprep.subr.bf16.mxu0 %v1237
    %1878 = vmatpush1.bf16.msra.mxu0 %v1236
    %1879 = vmatprep.subr.bf16.mxu0 %v1233
    %1880 = vmatpush1.bf16.msra.mxu0 %v1232
    %1881 = vmatprep.subr.bf16.mxu0 %v1229
    %1882 = vmatpush1.bf16.msra.mxu0 %v1228
    %1883 = vmatprep.subr.bf16.mxu0 %v1225
    %1884 = vmatpush1.bf16.msra.mxu0 %v1224
    %1885 = vmatprep.subr.bf16.mxu0 %v1221
    %1886 = vmatpush1.bf16.msra.mxu0 %v1220
    %1887 = vmatprep.subr.bf16.mxu0 %v1281
    %1888 = vmatpush2.bf16.msra.mxu0 %v1280
    %1889 = vmatprep.subr.bf16.mxu0 %v1277
    %1890 = vmatpush2.bf16.msra.mxu0 %v1276
    %1891 = vmatprep.subr.bf16.mxu0 %v1273
    %1892 = vmatpush2.bf16.msra.mxu0 %v1272
    %1893 = vmatprep.subr.bf16.mxu0 %v1269
    %1894 = vmatpush2.bf16.msra.mxu0 %v1268
    %1895 = vmatprep.subr.bf16.mxu0 %v1265
    %1896 = vmatpush2.bf16.msra.mxu0 %v1264
    %1897 = vmatprep.subr.bf16.mxu0 %v1261
    %1898 = vmatpush2.bf16.msra.mxu0 %v1260
    %1899 = vmatprep.subr.bf16.mxu0 %v1257
    %1900 = vmatpush2.bf16.msra.mxu0 %v1256
    %1901 = vmatprep.subr.bf16.mxu0 %v1253
    %1902 = vmatpush2.bf16.msra.mxu0 %v1252
    %1903 = vmatprep.mubr.bf16.mxu0 %v103
    %1904 = vmatmul.mubr.bf16.gmra.mxu0 %v102
    %v1905 = vpop.f32.mrf.mxu0
    %v1906 = vadd.f32 %v1865, %v1905
    %v1907 = vpop.f32.mrf.mxu0
    %v1908 = vadd.f32 %v1867, %v1907
    %v1909 = vpop.f32.mrf.mxu0
    %v1910 = vpop.f32.mrf.mxu0
    %1911 = vdwg.mxu0
    %1912 = vmatprep.subr.bf16.mxu0 %v1313
    %1913 = vmatpush1.bf16.msra.mxu0 %v1312
    %1914 = vmatprep.subr.bf16.mxu0 %v1309
    %1915 = vmatpush1.bf16.msra.mxu0 %v1308
    %1916 = vmatprep.subr.bf16.mxu0 %v1305
    %1917 = vmatpush1.bf16.msra.mxu0 %v1304
    %1918 = vmatprep.subr.bf16.mxu0 %v1301
    %1919 = vmatpush1.bf16.msra.mxu0 %v1300
    %1920 = vmatprep.subr.bf16.mxu0 %v1297
    %1921 = vmatpush1.bf16.msra.mxu0 %v1296
    %1922 = vmatprep.subr.bf16.mxu0 %v1293
    %1923 = vmatpush1.bf16.msra.mxu0 %v1292
    %1924 = vmatprep.subr.bf16.mxu0 %v1289
    %1925 = vmatpush1.bf16.msra.mxu0 %v1288
    %1926 = vmatprep.subr.bf16.mxu0 %v1285
    %1927 = vmatpush1.bf16.msra.mxu0 %v1284
    %1928 = vmatprep.subr.bf16.mxu0 %v1345
    %1929 = vmatpush2.bf16.msra.mxu0 %v1344
    %1930 = vmatprep.subr.bf16.mxu0 %v1341
    %1931 = vmatpush2.bf16.msra.mxu0 %v1340
    %1932 = vmatprep.subr.bf16.mxu0 %v1337
    %1933 = vmatpush2.bf16.msra.mxu0 %v1336
    %1934 = vmatprep.subr.bf16.mxu0 %v1333
    %1935 = vmatpush2.bf16.msra.mxu0 %v1332
    %1936 = vmatprep.subr.bf16.mxu0 %v1329
    %1937 = vmatpush2.bf16.msra.mxu0 %v1328
    %1938 = vmatprep.subr.bf16.mxu0 %v1325
    %1939 = vmatpush2.bf16.msra.mxu0 %v1324
    %1940 = vmatprep.subr.bf16.mxu0 %v1321
    %1941 = vmatpush2.bf16.msra.mxu0 %v1320
    %1942 = vmatprep.subr.bf16.mxu0 %v1317
    %1943 = vmatpush2.bf16.msra.mxu0 %v1316
    %1944 = vmatprep.mubr.bf16.mxu0 %v105
    %1945 = vmatmul.mubr.bf16.gmra.mxu0 %v104
    %v1946 = vpop.f32.mrf.mxu0
    %v1947 = vadd.f32 %v1906, %v1946
    %v1948 = vpop.f32.mrf.mxu0
    %v1949 = vadd.f32 %v1908, %v1948
    %v1950 = vpop.f32.mrf.mxu0
    %v1951 = vpop.f32.mrf.mxu0
    %1952 = vdwg.mxu0
    %1953 = vmatprep.subr.bf16.mxu0 %v1377
    %1954 = vmatpush1.bf16.msra.mxu0 %v1376
    %1955 = vmatprep.subr.bf16.mxu0 %v1373
    %1956 = vmatpush1.bf16.msra.mxu0 %v1372
    %1957 = vmatprep.subr.bf16.mxu0 %v1369
    %1958 = vmatpush1.bf16.msra.mxu0 %v1368
    %1959 = vmatprep.subr.bf16.mxu0 %v1365
    %1960 = vmatpush1.bf16.msra.mxu0 %v1364
    %1961 = vmatprep.subr.bf16.mxu0 %v1361
    %1962 = vmatpush1.bf16.msra.mxu0 %v1360
    %1963 = vmatprep.subr.bf16.mxu0 %v1357
    %1964 = vmatpush1.bf16.msra.mxu0 %v1356
    %1965 = vmatprep.subr.bf16.mxu0 %v1353
    %1966 = vmatpush1.bf16.msra.mxu0 %v1352
    %1967 = vmatprep.subr.bf16.mxu0 %v1349
    %1968 = vmatpush1.bf16.msra.mxu0 %v1348
    %1969 = vmatprep.subr.bf16.mxu0 %v1409
    %1970 = vmatpush2.bf16.msra.mxu0 %v1408
    %1971 = vmatprep.subr.bf16.mxu0 %v1405
    %1972 = vmatpush2.bf16.msra.mxu0 %v1404
    %1973 = vmatprep.subr.bf16.mxu0 %v1401
    %1974 = vmatpush2.bf16.msra.mxu0 %v1400
    %1975 = vmatprep.subr.bf16.mxu0 %v1397
    %1976 = vmatpush2.bf16.msra.mxu0 %v1396
    %1977 = vmatprep.subr.bf16.mxu0 %v1393
    %1978 = vmatpush2.bf16.msra.mxu0 %v1392
    %1979 = vmatprep.subr.bf16.mxu0 %v1389
    %1980 = vmatpush2.bf16.msra.mxu0 %v1388
    %1981 = vmatprep.subr.bf16.mxu0 %v1385
    %1982 = vmatpush2.bf16.msra.mxu0 %v1384
    %1983 = vmatprep.subr.bf16.mxu0 %v1381
    %1984 = vmatpush2.bf16.msra.mxu0 %v1380
    %1985 = vmatprep.mubr.bf16.mxu0 %v107
    %1986 = vmatmul.mubr.bf16.gmra.mxu0 %v106
    %v1987 = vpop.f32.mrf.mxu0
    %v1988 = vadd.f32 %v1947, %v1987
    %v1989 = vpop.f32.mrf.mxu0
    %v1990 = vadd.f32 %v1949, %v1989
    %v1991 = vpop.f32.mrf.mxu0
    %v1992 = vpop.f32.mrf.mxu0
    %1993 = vdwg.mxu0
    %v1994 = vmax.f32 %v1824, 0.0
    %v1995 = vmax.f32 %v1826, 0.0
    %v1996 = vmax.f32 %v1988, 0.0
    %v1997 = vmax.f32 %v1990, 0.0
    %v1998 = vpack.c.bf16 %v1994, %v1994
    %v1999 = vpack.c.bf16 %v1995, %v1995
    %v2000 = vpack.c.bf16 %v1996, %v1996
    %v2001 = vpack.c.bf16 %v1997, %v1997
    %v2002 = vld [vmem:[#allocation8] sm:$0xff]
    %v2003 = vld [vmem:[#allocation8 + $0x8] sm:$0xff]
    %v2004 = vld [vmem:[#allocation8 + $0x10] sm:$0xff]
    %v2005 = vld [vmem:[#allocation8 + $0x18] sm:$0xff]
    %v2006 = vld [vmem:[#allocation8 + $0x20] sm:$0xff]
    %v2007 = vld [vmem:[#allocation8 + $0x28] sm:$0xff]
    %v2008 = vld [vmem:[#allocation8 + $0x30] sm:$0xff]
    %v2009 = vld [vmem:[#allocation8 + $0x38] sm:$0xff]
    %v2010 = vld [vmem:[#allocation8 + $0x40] sm:$0xff]
    %v2011 = vld [vmem:[#allocation8 + $0x48] sm:$0xff]
    %v2012 = vld [vmem:[#allocation8 + $0x50] sm:$0xff]
    %v2013 = vld [vmem:[#allocation8 + $0x58] sm:$0xff]
    %v2014 = vld [vmem:[#allocation8 + $0x60] sm:$0xff]
    %v2015 = vld [vmem:[#allocation8 + $0x68] sm:$0xff]
    %v2016 = vld [vmem:[#allocation8 + $0x70] sm:$0xff]
    %v2017 = vld [vmem:[#allocation8 + $0x78] sm:$0xff]
    %v2018 = vld [vmem:[#allocation8 + $0x80] sm:$0xff]
    %v2019 = vld [vmem:[#allocation8 + $0x88] sm:$0xff]
    %v2020 = vld [vmem:[#allocation8 + $0x90] sm:$0xff]
    %v2021 = vld [vmem:[#allocation8 + $0x98] sm:$0xff]
    %v2022 = vld [vmem:[#allocation8 + $0xa0] sm:$0xff]
    %v2023 = vld [vmem:[#allocation8 + $0xa8] sm:$0xff]
    %v2024 = vld [vmem:[#allocation8 + $0xb0] sm:$0xff]
    %v2025 = vld [vmem:[#allocation8 + $0xb8] sm:$0xff]
    %v2026 = vld [vmem:[#allocation8 + $0xc0] sm:$0xff]
    %v2027 = vld [vmem:[#allocation8 + $0xc8] sm:$0xff]
    %v2028 = vld [vmem:[#allocation8 + $0xd0] sm:$0xff]
    %v2029 = vld [vmem:[#allocation8 + $0xd8] sm:$0xff]
    %v2030 = vld [vmem:[#allocation8 + $0xe0] sm:$0xff]
    %v2031 = vld [vmem:[#allocation8 + $0xe8] sm:$0xff]
    %v2032 = vld [vmem:[#allocation8 + $0xf0] sm:$0xff]
    %v2033 = vld [vmem:[#allocation8 + $0xf8] sm:$0xff]
    %v2034 = vld [vmem:[#allocation8 + $0x100] sm:$0xff]
    %v2035 = vld [vmem:[#allocation8 + $0x108] sm:$0xff]
    %v2036 = vld [vmem:[#allocation8 + $0x110] sm:$0xff]
    %v2037 = vld [vmem:[#allocation8 + $0x118] sm:$0xff]
    %v2038 = vld [vmem:[#allocation8 + $0x120] sm:$0xff]
    %v2039 = vld [vmem:[#allocation8 + $0x128] sm:$0xff]
    %v2040 = vld [vmem:[#allocation8 + $0x130] sm:$0xff]
    %v2041 = vld [vmem:[#allocation8 + $0x138] sm:$0xff]
    %v2042 = vld [vmem:[#allocation8 + $0x140] sm:$0xff]
    %v2043 = vld [vmem:[#allocation8 + $0x148] sm:$0xff]
    %v2044 = vld [vmem:[#allocation8 + $0x150] sm:$0xff]
    %v2045 = vld [vmem:[#allocation8 + $0x158] sm:$0xff]
    %v2046 = vld [vmem:[#allocation8 + $0x160] sm:$0xff]
    %v2047 = vld [vmem:[#allocation8 + $0x168] sm:$0xff]
    %v2048 = vld [vmem:[#allocation8 + $0x170] sm:$0xff]
    %v2049 = vld [vmem:[#allocation8 + $0x178] sm:$0xff]
    %v2050 = vld [vmem:[#allocation8 + $0x180] sm:$0xff]
    %v2051 = vld [vmem:[#allocation8 + $0x188] sm:$0xff]
    %v2052 = vld [vmem:[#allocation8 + $0x190] sm:$0xff]
    %v2053 = vld [vmem:[#allocation8 + $0x198] sm:$0xff]
    %v2054 = vld [vmem:[#allocation8 + $0x1a0] sm:$0xff]
    %v2055 = vld [vmem:[#allocation8 + $0x1a8] sm:$0xff]
    %v2056 = vld [vmem:[#allocation8 + $0x1b0] sm:$0xff]
    %v2057 = vld [vmem:[#allocation8 + $0x1b8] sm:$0xff]
    %v2058 = vld [vmem:[#allocation8 + $0x1c0] sm:$0xff]
    %v2059 = vld [vmem:[#allocation8 + $0x1c8] sm:$0xff]
    %v2060 = vld [vmem:[#allocation8 + $0x1d0] sm:$0xff]
    %v2061 = vld [vmem:[#allocation8 + $0x1d8] sm:$0xff]
    %v2062 = vld [vmem:[#allocation8 + $0x1e0] sm:$0xff]
    %v2063 = vld [vmem:[#allocation8 + $0x1e8] sm:$0xff]
    %v2064 = vld [vmem:[#allocation8 + $0x1f0] sm:$0xff]
    %v2065 = vld [vmem:[#allocation8 + $0x1f8] sm:$0xff]
    %v2066 = vld [vmem:[%s4] sm:$0x3]
    %v2068 = vlaneseq
    %v2069 = vshrl.u32 %v2068, 7
    %v2070 = vsub.s32 0, %v2069
    %v2071 = vrot.slane %v2066, %v2070
    %v2072 = vlaneseq
    %v2073 = vshrl.u32 %v2072, 7
    %v2074 = vsub.s32 1, %v2073
    %v2075 = vrot.slane %v2066, %v2074
    %v2142 = vunpack.c.l.b16 %v2002
    %v2143 = vunpack.c.h.b16 %v2002
    %v2144 = vunpack.c.l.b16 %v2003
    %v2145 = vunpack.c.h.b16 %v2003
    %v2146 = vunpack.c.l.b16 %v2004
    %v2147 = vunpack.c.h.b16 %v2004
    %v2148 = vunpack.c.l.b16 %v2005
    %v2149 = vunpack.c.h.b16 %v2005
    %v2150 = vunpack.c.l.b16 %v2006
    %v2151 = vunpack.c.h.b16 %v2006
    %v2152 = vunpack.c.l.b16 %v2007
    %v2153 = vunpack.c.h.b16 %v2007
    %v2154 = vunpack.c.l.b16 %v2008
    %v2155 = vunpack.c.h.b16 %v2008
    %v2156 = vunpack.c.l.b16 %v2009
    %v2157 = vunpack.c.h.b16 %v2009
    %v2158 = vunpack.c.l.b16 %v2010
    %v2159 = vunpack.c.h.b16 %v2010
    %v2160 = vunpack.c.l.b16 %v2011
    %v2161 = vunpack.c.h.b16 %v2011
    %v2162 = vunpack.c.l.b16 %v2012
    %v2163 = vunpack.c.h.b16 %v2012
    %v2164 = vunpack.c.l.b16 %v2013
    %v2165 = vunpack.c.h.b16 %v2013
    %v2166 = vunpack.c.l.b16 %v2014
    %v2167 = vunpack.c.h.b16 %v2014
    %v2168 = vunpack.c.l.b16 %v2015
    %v2169 = vunpack.c.h.b16 %v2015
    %v2170 = vunpack.c.l.b16 %v2016
    %v2171 = vunpack.c.h.b16 %v2016
    %v2172 = vunpack.c.l.b16 %v2017
    %v2173 = vunpack.c.h.b16 %v2017
    %v2174 = vunpack.c.l.b16 %v2018
    %v2175 = vunpack.c.h.b16 %v2018
    %v2176 = vunpack.c.l.b16 %v2019
    %v2177 = vunpack.c.h.b16 %v2019
    %v2178 = vunpack.c.l.b16 %v2020
    %v2179 = vunpack.c.h.b16 %v2020
    %v2180 = vunpack.c.l.b16 %v2021
    %v2181 = vunpack.c.h.b16 %v2021
    %v2182 = vunpack.c.l.b16 %v2022
    %v2183 = vunpack.c.h.b16 %v2022
    %v2184 = vunpack.c.l.b16 %v2023
    %v2185 = vunpack.c.h.b16 %v2023
    %v2186 = vunpack.c.l.b16 %v2024
    %v2187 = vunpack.c.h.b16 %v2024
    %v2188 = vunpack.c.l.b16 %v2025
    %v2189 = vunpack.c.h.b16 %v2025
    %v2190 = vunpack.c.l.b16 %v2026
    %v2191 = vunpack.c.h.b16 %v2026
    %v2192 = vunpack.c.l.b16 %v2027
    %v2193 = vunpack.c.h.b16 %v2027
    %v2194 = vunpack.c.l.b16 %v2028
    %v2195 = vunpack.c.h.b16 %v2028
    %v2196 = vunpack.c.l.b16 %v2029
    %v2197 = vunpack.c.h.b16 %v2029
    %v2198 = vunpack.c.l.b16 %v2030
    %v2199 = vunpack.c.h.b16 %v2030
    %v2200 = vunpack.c.l.b16 %v2031
    %v2201 = vunpack.c.h.b16 %v2031
    %v2202 = vunpack.c.l.b16 %v2032
    %v2203 = vunpack.c.h.b16 %v2032
    %v2204 = vunpack.c.l.b16 %v2033
    %v2205 = vunpack.c.h.b16 %v2033
    %v2206 = vunpack.c.l.b16 %v2034
    %v2207 = vunpack.c.h.b16 %v2034
    %v2208 = vunpack.c.l.b16 %v2035
    %v2209 = vunpack.c.h.b16 %v2035
    %v2210 = vunpack.c.l.b16 %v2036
    %v2211 = vunpack.c.h.b16 %v2036
    %v2212 = vunpack.c.l.b16 %v2037
    %v2213 = vunpack.c.h.b16 %v2037
    %v2214 = vunpack.c.l.b16 %v2038
    %v2215 = vunpack.c.h.b16 %v2038
    %v2216 = vunpack.c.l.b16 %v2039
    %v2217 = vunpack.c.h.b16 %v2039
    %v2218 = vunpack.c.l.b16 %v2040
    %v2219 = vunpack.c.h.b16 %v2040
    %v2220 = vunpack.c.l.b16 %v2041
    %v2221 = vunpack.c.h.b16 %v2041
    %v2222 = vunpack.c.l.b16 %v2042
    %v2223 = vunpack.c.h.b16 %v2042
    %v2224 = vunpack.c.l.b16 %v2043
    %v2225 = vunpack.c.h.b16 %v2043
    %v2226 = vunpack.c.l.b16 %v2044
    %v2227 = vunpack.c.h.b16 %v2044
    %v2228 = vunpack.c.l.b16 %v2045
    %v2229 = vunpack.c.h.b16 %v2045
    %v2230 = vunpack.c.l.b16 %v2046
    %v2231 = vunpack.c.h.b16 %v2046
    %v2232 = vunpack.c.l.b16 %v2047
    %v2233 = vunpack.c.h.b16 %v2047
    %v2234 = vunpack.c.l.b16 %v2048
    %v2235 = vunpack.c.h.b16 %v2048
    %v2236 = vunpack.c.l.b16 %v2049
    %v2237 = vunpack.c.h.b16 %v2049
    %v2238 = vunpack.c.l.b16 %v2050
    %v2239 = vunpack.c.h.b16 %v2050
    %v2240 = vunpack.c.l.b16 %v2051
    %v2241 = vunpack.c.h.b16 %v2051
    %v2242 = vunpack.c.l.b16 %v2052
    %v2243 = vunpack.c.h.b16 %v2052
    %v2244 = vunpack.c.l.b16 %v2053
    %v2245 = vunpack.c.h.b16 %v2053
    %v2246 = vunpack.c.l.b16 %v2054
    %v2247 = vunpack.c.h.b16 %v2054
    %v2248 = vunpack.c.l.b16 %v2055
    %v2249 = vunpack.c.h.b16 %v2055
    %v2250 = vunpack.c.l.b16 %v2056
    %v2251 = vunpack.c.h.b16 %v2056
    %v2252 = vunpack.c.l.b16 %v2057
    %v2253 = vunpack.c.h.b16 %v2057
    %v2254 = vunpack.c.l.b16 %v2058
    %v2255 = vunpack.c.h.b16 %v2058
    %v2256 = vunpack.c.l.b16 %v2059
    %v2257 = vunpack.c.h.b16 %v2059
    %v2258 = vunpack.c.l.b16 %v2060
    %v2259 = vunpack.c.h.b16 %v2060
    %v2260 = vunpack.c.l.b16 %v2061
    %v2261 = vunpack.c.h.b16 %v2061
    %v2262 = vunpack.c.l.b16 %v2062
    %v2263 = vunpack.c.h.b16 %v2062
    %v2264 = vunpack.c.l.b16 %v2063
    %v2265 = vunpack.c.h.b16 %v2063
    %v2266 = vunpack.c.l.b16 %v2064
    %v2267 = vunpack.c.h.b16 %v2064
    %v2268 = vunpack.c.l.b16 %v2065
    %v2269 = vunpack.c.h.b16 %v2065
    %v2270 = vpack.c.b16 %v2144, %v2142
    %v2271 = vpack.c.b16 %v2145, %v2143
    %v2272 = vpack.c.b16 %v2148, %v2146
    %v2273 = vpack.c.b16 %v2149, %v2147
    %v2274 = vpack.c.b16 %v2152, %v2150
    %v2275 = vpack.c.b16 %v2153, %v2151
    %v2276 = vpack.c.b16 %v2156, %v2154
    %v2277 = vpack.c.b16 %v2157, %v2155
    %v2278 = vpack.c.b16 %v2160, %v2158
    %v2279 = vpack.c.b16 %v2161, %v2159
    %v2280 = vpack.c.b16 %v2164, %v2162
    %v2281 = vpack.c.b16 %v2165, %v2163
    %v2282 = vpack.c.b16 %v2168, %v2166
    %v2283 = vpack.c.b16 %v2169, %v2167
    %v2284 = vpack.c.b16 %v2172, %v2170
    %v2285 = vpack.c.b16 %v2173, %v2171
    %v2286 = vpack.c.b16 %v2176, %v2174
    %v2287 = vpack.c.b16 %v2177, %v2175
    %v2288 = vpack.c.b16 %v2180, %v2178
    %v2289 = vpack.c.b16 %v2181, %v2179
    %v2290 = vpack.c.b16 %v2184, %v2182
    %v2291 = vpack.c.b16 %v2185, %v2183
    %v2292 = vpack.c.b16 %v2188, %v2186
    %v2293 = vpack.c.b16 %v2189, %v2187
    %v2294 = vpack.c.b16 %v2192, %v2190
    %v2295 = vpack.c.b16 %v2193, %v2191
    %v2296 = vpack.c.b16 %v2196, %v2194
    %v2297 = vpack.c.b16 %v2197, %v2195
    %v2298 = vpack.c.b16 %v2200, %v2198
    %v2299 = vpack.c.b16 %v2201, %v2199
    %v2300 = vpack.c.b16 %v2204, %v2202
    %v2301 = vpack.c.b16 %v2205, %v2203
    %v2302 = vpack.c.b16 %v2208, %v2206
    %v2303 = vpack.c.b16 %v2209, %v2207
    %v2304 = vpack.c.b16 %v2212, %v2210
    %v2305 = vpack.c.b16 %v2213, %v2211
    %v2306 = vpack.c.b16 %v2216, %v2214
    %v2307 = vpack.c.b16 %v2217, %v2215
    %v2308 = vpack.c.b16 %v2220, %v2218
    %v2309 = vpack.c.b16 %v2221, %v2219
    %v2310 = vpack.c.b16 %v2224, %v2222
    %v2311 = vpack.c.b16 %v2225, %v2223
    %v2312 = vpack.c.b16 %v2228, %v2226
    %v2313 = vpack.c.b16 %v2229, %v2227
    %v2314 = vpack.c.b16 %v2232, %v2230
    %v2315 = vpack.c.b16 %v2233, %v2231
    %v2316 = vpack.c.b16 %v2236, %v2234
    %v2317 = vpack.c.b16 %v2237, %v2235
    %v2318 = vpack.c.b16 %v2240, %v2238
    %v2319 = vpack.c.b16 %v2241, %v2239
    %v2320 = vpack.c.b16 %v2244, %v2242
    %v2321 = vpack.c.b16 %v2245, %v2243
    %v2322 = vpack.c.b16 %v2248, %v2246
    %v2323 = vpack.c.b16 %v2249, %v2247
    %v2324 = vpack.c.b16 %v2252, %v2250
    %v2325 = vpack.c.b16 %v2253, %v2251
    %v2326 = vpack.c.b16 %v2256, %v2254
    %v2327 = vpack.c.b16 %v2257, %v2255
    %v2328 = vpack.c.b16 %v2260, %v2258
    %v2329 = vpack.c.b16 %v2261, %v2259
    %v2330 = vpack.c.b16 %v2264, %v2262
    %v2331 = vpack.c.b16 %v2265, %v2263
    %v2332 = vpack.c.b16 %v2268, %v2266
    %v2333 = vpack.c.b16 %v2269, %v2267
    %2398 = vmatprep.subr.bf16.mxu0 %v2285
    %2399 = vmatpush1.bf16.msra.mxu0 %v2284
    %2400 = vmatprep.subr.bf16.mxu0 %v2283
    %2401 = vmatpush1.bf16.msra.mxu0 %v2282
    %2402 = vmatprep.subr.bf16.mxu0 %v2281
    %2403 = vmatpush1.bf16.msra.mxu0 %v2280
    %2404 = vmatprep.subr.bf16.mxu0 %v2279
    %2405 = vmatpush1.bf16.msra.mxu0 %v2278
    %2406 = vmatprep.subr.bf16.mxu0 %v2277
    %2407 = vmatpush1.bf16.msra.mxu0 %v2276
    %2408 = vmatprep.subr.bf16.mxu0 %v2275
    %2409 = vmatpush1.bf16.msra.mxu0 %v2274
    %2410 = vmatprep.subr.bf16.mxu0 %v2273
    %2411 = vmatpush1.bf16.msra.mxu0 %v2272
    %2412 = vmatprep.subr.bf16.mxu0 %v2271
    %2413 = vmatpush1.bf16.msra.mxu0 %v2270
    %2414 = vmatprep.subr.bf16.mxu0 %v2301
    %2415 = vmatpush2.bf16.msra.mxu0 %v2300
    %2416 = vmatprep.subr.bf16.mxu0 %v2299
    %2417 = vmatpush2.bf16.msra.mxu0 %v2298
    %2418 = vmatprep.subr.bf16.mxu0 %v2297
    %2419 = vmatpush2.bf16.msra.mxu0 %v2296
    %2420 = vmatprep.subr.bf16.mxu0 %v2295
    %2421 = vmatpush2.bf16.msra.mxu0 %v2294
    %2422 = vmatprep.subr.bf16.mxu0 %v2293
    %2423 = vmatpush2.bf16.msra.mxu0 %v2292
    %2424 = vmatprep.subr.bf16.mxu0 %v2291
    %2425 = vmatpush2.bf16.msra.mxu0 %v2290
    %2426 = vmatprep.subr.bf16.mxu0 %v2289
    %2427 = vmatpush2.bf16.msra.mxu0 %v2288
    %2428 = vmatprep.subr.bf16.mxu0 %v2287
    %2429 = vmatpush2.bf16.msra.mxu0 %v2286
    %2430 = vmatprep.mubr.bf16.mxu0 %v1999
    %2431 = vmatmul.mubr.bf16.gmra.mxu0 %v1998
    %v2432 = vpop.f32.mrf.mxu0
    %v2433 = vadd.f32 %v2071, %v2432
    %v2434 = vpop.f32.mrf.mxu0
    %v2435 = vadd.f32 %v2075, %v2434
    %v2436 = vpop.f32.mrf.mxu0
    %v2437 = vpop.f32.mrf.mxu0
    %2438 = vdwg.mxu0
    %2439 = vmatprep.subr.bf16.mxu0 %v2317
    %2440 = vmatpush1.bf16.msra.mxu0 %v2316
    %2441 = vmatprep.subr.bf16.mxu0 %v2315
    %2442 = vmatpush1.bf16.msra.mxu0 %v2314
    %2443 = vmatprep.subr.bf16.mxu0 %v2313
    %2444 = vmatpush1.bf16.msra.mxu0 %v2312
    %2445 = vmatprep.subr.bf16.mxu0 %v2311
    %2446 = vmatpush1.bf16.msra.mxu0 %v2310
    %2447 = vmatprep.subr.bf16.mxu0 %v2309
    %2448 = vmatpush1.bf16.msra.mxu0 %v2308
    %2449 = vmatprep.subr.bf16.mxu0 %v2307
    %2450 = vmatpush1.bf16.msra.mxu0 %v2306
    %2451 = vmatprep.subr.bf16.mxu0 %v2305
    %2452 = vmatpush1.bf16.msra.mxu0 %v2304
    %2453 = vmatprep.subr.bf16.mxu0 %v2303
    %2454 = vmatpush1.bf16.msra.mxu0 %v2302
    %2455 = vmatprep.subr.bf16.mxu0 %v2333
    %2456 = vmatpush2.bf16.msra.mxu0 %v2332
    %2457 = vmatprep.subr.bf16.mxu0 %v2331
    %2458 = vmatpush2.bf16.msra.mxu0 %v2330
    %2459 = vmatprep.subr.bf16.mxu0 %v2329
    %2460 = vmatpush2.bf16.msra.mxu0 %v2328
    %2461 = vmatprep.subr.bf16.mxu0 %v2327
    %2462 = vmatpush2.bf16.msra.mxu0 %v2326
    %2463 = vmatprep.subr.bf16.mxu0 %v2325
    %2464 = vmatpush2.bf16.msra.mxu0 %v2324
    %2465 = vmatprep.subr.bf16.mxu0 %v2323
    %2466 = vmatpush2.bf16.msra.mxu0 %v2322
    %2467 = vmatprep.subr.bf16.mxu0 %v2321
    %2468 = vmatpush2.bf16.msra.mxu0 %v2320
    %2469 = vmatprep.subr.bf16.mxu0 %v2319
    %2470 = vmatpush2.bf16.msra.mxu0 %v2318
    %2471 = vmatprep.mubr.bf16.mxu0 %v2001
    %2472 = vmatmul.mubr.bf16.gmra.mxu0 %v2000
    %v2473 = vpop.f32.mrf.mxu0
    %v2474 = vadd.f32 %v2433, %v2473
    %v2475 = vpop.f32.mrf.mxu0
    %v2476 = vadd.f32 %v2435, %v2475
    %v2477 = vpop.f32.mrf.mxu0
    %v2478 = vpop.f32.mrf.mxu0
    %2479 = vdwg.mxu0
    %v2480 = vmax.f32 %v2474, 0.0
    %v2481 = vmax.f32 %v2476, 0.0
    %v2482 = vpack.c.bf16 %v2480, %v2480
    %v2483 = vpack.c.bf16 %v2481, %v2481
    %v2484 = vld [vmem:[#allocation10] sm:$0xf]
    %v2485 = vld [vmem:[#allocation10 + $0x4] sm:$0xf]
    %v2486 = vld [vmem:[#allocation10 + $0x8] sm:$0xf]
    %v2487 = vld [vmem:[#allocation10 + $0xc] sm:$0xf]
    %v2488 = vld [vmem:[#allocation10 + $0x10] sm:$0xf]
    %v2489 = vld [vmem:[#allocation10 + $0x14] sm:$0xf]
    %v2490 = vld [vmem:[#allocation10 + $0x18] sm:$0xf]
    %v2491 = vld [vmem:[#allocation10 + $0x1c] sm:$0xf]
    %v2492 = vld [vmem:[#allocation10 + $0x20] sm:$0xf]
    %v2493 = vld [vmem:[#allocation10 + $0x24] sm:$0xf]
    %v2494 = vld [vmem:[#allocation10 + $0x28] sm:$0xf]
    %v2495 = vld [vmem:[#allocation10 + $0x2c] sm:$0xf]
    %v2496 = vld [vmem:[#allocation10 + $0x30] sm:$0xf]
    %v2497 = vld [vmem:[#allocation10 + $0x34] sm:$0xf]
    %v2498 = vld [vmem:[#allocation10 + $0x38] sm:$0xf]
    %v2499 = vld [vmem:[#allocation10 + $0x3c] sm:$0xf]
    %v2500 = vld [vmem:[#allocation10 + $0x40] sm:$0xf]
    %v2501 = vld [vmem:[#allocation10 + $0x44] sm:$0xf]
    %v2502 = vld [vmem:[#allocation10 + $0x48] sm:$0xf]
    %v2503 = vld [vmem:[#allocation10 + $0x4c] sm:$0xf]
    %v2504 = vld [vmem:[#allocation10 + $0x50] sm:$0xf]
    %v2505 = vld [vmem:[#allocation10 + $0x54] sm:$0xf]
    %v2506 = vld [vmem:[#allocation10 + $0x58] sm:$0xf]
    %v2507 = vld [vmem:[#allocation10 + $0x5c] sm:$0xf]
    %v2508 = vld [vmem:[#allocation10 + $0x60] sm:$0xf]
    %v2509 = vld [vmem:[#allocation10 + $0x64] sm:$0xf]
    %v2510 = vld [vmem:[#allocation10 + $0x68] sm:$0xf]
    %v2511 = vld [vmem:[#allocation10 + $0x6c] sm:$0xf]
    %v2512 = vld [vmem:[#allocation10 + $0x70] sm:$0xf]
    %v2513 = vld [vmem:[#allocation10 + $0x74] sm:$0xf]
    %v2514 = vld [vmem:[#allocation10 + $0x78] sm:$0xf]
    %v2515 = vld [vmem:[#allocation10 + $0x7c] sm:$0xf]
    %v2516 = vld [vmem:[%s6] sm:$0x1]
    %v2518 = vlaneseq
    %v2519 = vshrl.u32 %v2518, 7
    %v2520 = vsub.s32 0, %v2519
    %v2521 = vrot.slane %v2516, %v2520
    %v2555 = vunpack.c.l.b16 %v2484
    %v2556 = vunpack.c.l.b16 %v2485
    %v2557 = vunpack.c.l.b16 %v2486
    %v2558 = vunpack.c.l.b16 %v2487
    %v2559 = vunpack.c.l.b16 %v2488
    %v2560 = vunpack.c.l.b16 %v2489
    %v2561 = vunpack.c.l.b16 %v2490
    %v2562 = vunpack.c.l.b16 %v2491
    %v2563 = vunpack.c.l.b16 %v2492
    %v2564 = vunpack.c.l.b16 %v2493
    %v2565 = vunpack.c.l.b16 %v2494
    %v2566 = vunpack.c.l.b16 %v2495
    %v2567 = vunpack.c.l.b16 %v2496
    %v2568 = vunpack.c.l.b16 %v2497
    %v2569 = vunpack.c.l.b16 %v2498
    %v2570 = vunpack.c.l.b16 %v2499
    %v2571 = vunpack.c.l.b16 %v2500
    %v2572 = vunpack.c.l.b16 %v2501
    %v2573 = vunpack.c.l.b16 %v2502
    %v2574 = vunpack.c.l.b16 %v2503
    %v2575 = vunpack.c.l.b16 %v2504
    %v2576 = vunpack.c.l.b16 %v2505
    %v2577 = vunpack.c.l.b16 %v2506
    %v2578 = vunpack.c.l.b16 %v2507
    %v2579 = vunpack.c.l.b16 %v2508
    %v2580 = vunpack.c.l.b16 %v2509
    %v2581 = vunpack.c.l.b16 %v2510
    %v2582 = vunpack.c.l.b16 %v2511
    %v2583 = vunpack.c.l.b16 %v2512
    %v2584 = vunpack.c.l.b16 %v2513
    %v2585 = vunpack.c.l.b16 %v2514
    %v2586 = vunpack.c.l.b16 %v2515
    %v2587 = vpack.c.b16 %v2556, %v2555
    %v2588 = vpack.c.b16 %v2558, %v2557
    %v2589 = vpack.c.b16 %v2560, %v2559
    %v2590 = vpack.c.b16 %v2562, %v2561
    %v2591 = vpack.c.b16 %v2564, %v2563
    %v2592 = vpack.c.b16 %v2566, %v2565
    %v2593 = vpack.c.b16 %v2568, %v2567
    %v2594 = vpack.c.b16 %v2570, %v2569
    %v2595 = vpack.c.b16 %v2572, %v2571
    %v2596 = vpack.c.b16 %v2574, %v2573
    %v2597 = vpack.c.b16 %v2576, %v2575
    %v2598 = vpack.c.b16 %v2578, %v2577
    %v2599 = vpack.c.b16 %v2580, %v2579
    %v2600 = vpack.c.b16 %v2582, %v2581
    %v2601 = vpack.c.b16 %v2584, %v2583
    %v2602 = vpack.c.b16 %v2586, %v2585
    %2619 = vmatprep.subr.bf16.mxu0 0
    %2620 = vmatpush1.bf16.msra.mxu0 %v2594
    %2621 = vmatprep.subr.bf16.mxu0 0
    %2622 = vmatpush1.bf16.msra.mxu0 %v2593
    %2623 = vmatprep.subr.bf16.mxu0 0
    %2624 = vmatpush1.bf16.msra.mxu0 %v2592
    %2625 = vmatprep.subr.bf16.mxu0 0
    %2626 = vmatpush1.bf16.msra.mxu0 %v2591
    %2627 = vmatprep.subr.bf16.mxu0 0
    %2628 = vmatpush1.bf16.msra.mxu0 %v2590
    %2629 = vmatprep.subr.bf16.mxu0 0
    %2630 = vmatpush1.bf16.msra.mxu0 %v2589
    %2631 = vmatprep.subr.bf16.mxu0 0
    %2632 = vmatpush1.bf16.msra.mxu0 %v2588
    %2633 = vmatprep.subr.bf16.mxu0 0
    %2634 = vmatpush1.bf16.msra.mxu0 %v2587
    %2635 = vmatprep.subr.bf16.mxu0 0
    %2636 = vmatpush2.bf16.msra.mxu0 %v2602
    %2637 = vmatprep.subr.bf16.mxu0 0
    %2638 = vmatpush2.bf16.msra.mxu0 %v2601
    %2639 = vmatprep.subr.bf16.mxu0 0
    %2640 = vmatpush2.bf16.msra.mxu0 %v2600
    %2641 = vmatprep.subr.bf16.mxu0 0
    %2642 = vmatpush2.bf16.msra.mxu0 %v2599
    %2643 = vmatprep.subr.bf16.mxu0 0
    %2644 = vmatpush2.bf16.msra.mxu0 %v2598
    %2645 = vmatprep.subr.bf16.mxu0 0
    %2646 = vmatpush2.bf16.msra.mxu0 %v2597
    %2647 = vmatprep.subr.bf16.mxu0 0
    %2648 = vmatpush2.bf16.msra.mxu0 %v2596
    %2649 = vmatprep.subr.bf16.mxu0 0
    %2650 = vmatpush2.bf16.msra.mxu0 %v2595
    %2651 = vmatprep.mubr.bf16.mxu0 %v2483
    %2652 = vmatmul.mubr.bf16.gmra.mxu0 %v2482
    %v2653 = vpop.f32.mrf.mxu0
    %v2654 = vadd.f32 %v2521, %v2653
    %v2655 = vpop.f32.mrf.mxu0
    %v2656 = vpop.f32.mrf.mxu0
    %v2657 = vpop.f32.mrf.mxu0
    %2658 = vdwg.mxu0
    %2659 = vst [vmem:[#allocation11] sm:$0xff] %v2654
    // Predicated region
    $region50: #{tpu_custom_call.1} parent=1 // pred_check
      _
    $region51: #{tpu_custom_call.1} parent=1 // pred_check_branch
      %2661 = sbr.rel (0) target = $region53
    $region52: #{tpu_custom_call.1} parent=1 // pred_region
      %s2663 = ssub.s32 128, 128
      %2664 = vsyncadd [#allocation4], %s2663
      %s2666 = sshll.u32 [#allocation11], 4
      %s2667 = int_to_ptr.vmem [resolvable:$true] %s2666
      %2669 = dma.vmem_to_hbm [thread:$0]  %s2667, 128, %s7, [#allocation4]
    $region53: #{tpu_custom_call.1} parent=1 // pred_fallthru
      _
    // Predicated region
    $region54: #{tpu_custom_call.1} parent=1 // pred_check
      _
    $region55: #{tpu_custom_call.1} parent=1 // pred_check_branch
      %2671 = sbr.rel (0) target = $region57
    $region56: #{tpu_custom_call.1} parent=1 // pred_region
      %2672 = dma.done [#allocation4], 128
    $region57: #{tpu_custom_call.1} parent=1 // pred_fallthru
      _
    %2673 = vsyncpa [#allocation3], 1
    %2674 = vsyncpa [#allocation6], 1
    %2675 = vsyncpa [#allocation9], 1
    %2676 = vsyncpa [#allocation4], 1

</llo_original>
